<compile_context>
chip_gen: v5e
topology: v5e:2x2
jax: 0.10.0
libtpu: 0.0.40
codegen_flags: <defaults>
</compile_context>

<pallas_src>
import functools

import jax
import jax.numpy as jnp
from jax.experimental import pallas as pl
from jax.experimental.pallas import tpu as pltpu

# ---------------- model sizes (small, consistent with the module) ----------------
V = 100   # vocab size
E = 32    # embedding size
C = 4     # number of classes
HID = 32  # LSTM hidden size h  (bidirectional -> H = 2*h = 64)
B = 2     # batch
L = 8     # max sequence length


# ---------------------------------- kernel ---------------------------------------
def bilstm_kernel(ids_ref,     # (B, L)   int32  SMEM: token ids (0 = pad)
                  mask_ref,    # (B, L)   int32  VMEM: attention mask
                  emb_ref,     # (V, E)   f32    VMEM: embedding table (resident)
                  w_in_ref,    # (2E, 8h) f32    fused input projection (gate-interleaved)
                  b2_ref,      # (1, 8h)  f32    fused bias (b_ih + b_hh, both dirs)
                  whh_ref,     # (2h, 8h) f32    block-diag recurrent weight (interleaved)
                  wout_ref,    # (2h, C)  f32    classifier weight [fwd half; bwd half]
                  bout_ref,    # (1, C)   f32
                  out_ref,     # (B, C)   f32
                  x_ref,       # (L*B, 2E) VMEM scratch: [x_t | x_{L-1-t}] time-major
                  *, hidden, seq_len, batch, emb_dim):
    h = hidden
    h2 = 2 * h      # both directions stacked along lanes

    # ---- in-kernel embedding gather (SMEM scalar ids -> VMEM table rows) ----
    # Each token row is written twice: fwd slot of its own step, bwd slot of the
    # mirrored step. This keeps the gate columns interleaved so the transcendentals
    # below operate on contiguous lane blocks.
    for t in range(seq_len):
        rt = seq_len - 1 - t
        for b in range(batch):
            tok = ids_ref[b, t]                                   # SMEM scalar
            row = emb_ref[pl.ds(tok, 1), :]                       # (1, E) dynamic row
            r_f = t * batch + b
            r_b = rt * batch + b
            x_ref[r_f:r_f + 1, 0:emb_dim] = row                   # fwd slot @ step t
            x_ref[r_b:r_b + 1, emb_dim:2 * emb_dim] = row         # bwd slot @ step L-1-t

    # ---- hoisted input projection: one MXU op covers all steps & both directions ----
    gin = (jnp.dot(x_ref[...], w_in_ref[...], preferred_element_type=jnp.float32)
           + b2_ref[...])                                         # (L*B, 8h), vreg-resident

    maskf = mask_ref[...].astype(jnp.float32)                     # (B, L)
    whh = whh_ref[...]                                            # (2h, 8h)

    h_cat = jnp.zeros((batch, h2), jnp.float32)
    c_cat = jnp.zeros((batch, h2), jnp.float32)
    acc = jnp.zeros((batch, h2), jnp.float32)

    # ---- merged fwd+bwd recurrence, fully unrolled with static indices ----
    for t in range(seq_len):
        rt = seq_len - 1 - t
        g_in = gin[t * batch:(t + 1) * batch, :]                  # (B, 8h) static slice
        gates = g_in + jnp.dot(h_cat, whh,
                               preferred_element_type=jnp.float32)  # (B, 8h)

        # gate layout: [i_f,i_b | f_f,f_b | o_f,o_b | g_f,g_b]
        sig = jax.nn.sigmoid(gates[:, 0:3 * h2])                  # (B, 6h) contiguous
        g_g = jnp.tanh(gates[:, 3 * h2:4 * h2])                   # (B, 2h)
        i_g = sig[:, 0 * h2:1 * h2]
        f_g = sig[:, 1 * h2:2 * h2]
        o_g = sig[:, 2 * h2:3 * h2]

        c_new = f_g * c_cat + i_g * g_g                           # (B, 2h)
        h_new = o_g * jnp.tanh(c_new)                             # (B, 2h)

        # packed-sequence masking: fwd half uses mask[t], bwd half uses mask[L-1-t]
        m_f = maskf[:, t:t + 1]                                   # (B, 1)
        m_b = maskf[:, rt:rt + 1]                                 # (B, 1)
        m2 = jnp.concatenate([jnp.broadcast_to(m_f, (batch, h)),
                              jnp.broadcast_to(m_b, (batch, h))], axis=1)  # (B, 2h)

        acc = acc + m2 * h_new
        h_cat = h_cat + m2 * (h_new - h_cat)                      # freeze carry on pads
        c_cat = c_cat + m2 * (c_new - c_cat)

    # ---- epilogue: mean over padded time T = max(lengths); fused classifier ----
    # dropout (p=0.5): inference-mode identity
    # TODO(synk): training-mode stochastic dropout not implemented (inference semantics).
    t_len = jnp.sum(maskf, axis=1, keepdims=True)                 # (B, 1)
    t_max = jnp.max(t_len, axis=0, keepdims=True)                 # (1, 1)
    inv_t = 1.0 / jnp.maximum(t_max, 1.0)                         # (1, 1)
    logits = (jnp.dot(acc, wout_ref[...], preferred_element_type=jnp.float32) * inv_t
              + bout_ref[...])
    out_ref[...] = logits.astype(out_ref.dtype)


# -------------------- one-time parameter fusion (NOT on the hot path) --------------------
def _reorder_ifog(w, h):
    """(K, 4h) with PyTorch gate order [i,f,g,o] -> [i,f,o,g] so sigmoid gates lead."""
    return jnp.concatenate([w[:, 0:h], w[:, h:2 * h], w[:, 3 * h:4 * h], w[:, 2 * h:3 * h]],
                           axis=1)


def _interleave_gate_cols(wf, wb, h):
    """(K, 4h), (K, 4h) -> (K, 8h) with columns [i_f,i_b,f_f,f_b,o_f,o_b,g_f,g_b]."""
    k = wf.shape[0]
    return jnp.concatenate(
        [wf.reshape(k, 4, h), wb.reshape(k, 4, h)], axis=2).reshape(k, 8 * h)


def fuse_params(params):
    """Builds fused/interleaved weights once at init; cache the result."""
    h = HID
    wih_f = _reorder_ifog(params["wih_f"], h)
    wih_b = _reorder_ifog(params["wih_b"], h)
    whh_f = _reorder_ifog(params["whh_f"], h)
    whh_b = _reorder_ifog(params["whh_b"], h)
    b_f = _reorder_ifog(params["b_f"], h)
    b_b = _reorder_ifog(params["b_b"], h)

    zE = jnp.zeros((E, 4 * h), jnp.float32)
    zH = jnp.zeros((h, 4 * h), jnp.float32)
    w_in = jnp.concatenate([_interleave_gate_cols(wih_f, zE, h),
                            _interleave_gate_cols(zE, wih_b, h)], axis=0)      # (2E, 8h)
    whh = jnp.concatenate([_interleave_gate_cols(whh_f, zH, h),
                           _interleave_gate_cols(zH, whh_b, h)], axis=0)       # (2h, 8h)
    b2 = _interleave_gate_cols(b_f, b_b, h)                                    # (1, 8h)
    wout = jnp.concatenate([params["wout_f"], params["wout_b"]], axis=0)       # (2h, C)

    fused = {"emb": params["emb"].astype(jnp.float32), "w_in": w_in, "b2": b2,
             "whh": whh, "wout": wout, "bout": params["bout"]}
    return jax.tree_util.tree_map(jax.block_until_ready, fused)                # materialize once


# ------------------------------- hot-path wrapper -----------------------------------
def bilstm_forward(ids, attention_mask, fused):
    """ids/attention_mask: (B, L) int32. `fused` comes from fuse_params (cached)."""
    h = HID
    kernel = functools.partial(bilstm_kernel, hidden=h, seq_len=L, batch=B, emb_dim=E)
    return pl.pallas_call(
        kernel,
        out_shape=jax.ShapeDtypeStruct((B, C), jnp.float32),
        grid=(1,),
        in_specs=[
            pl.BlockSpec(memory_space=pltpu.MemorySpace.SMEM),        # ids (scalars)
            pl.BlockSpec((B, L), lambda i: (0, 0)),                   # attention mask
            pl.BlockSpec((V, E), lambda i: (0, 0)),                   # embedding table
            pl.BlockSpec((2 * E, 8 * h), lambda i: (0, 0)),           # w_in
            pl.BlockSpec((1, 8 * h), lambda i: (0, 0)),               # b2
            pl.BlockSpec((2 * h, 8 * h), lambda i: (0, 0)),           # whh block-diag
            pl.BlockSpec((2 * h, C), lambda i: (0, 0)),               # wout
            pl.BlockSpec((1, C), lambda i: (0, 0)),                   # bout
        ],
        out_specs=pl.BlockSpec((B, C), lambda i: (0, 0)),
        scratch_shapes=[pltpu.VMEM((L * B, 2 * E), jnp.float32)],     # gathered [x_t | x_rev]
        compiler_params=pltpu.CompilerParams(dimension_semantics=("arbitrary",)),
    )(ids, attention_mask, fused["emb"], fused["w_in"], fused["b2"],
      fused["whh"], fused["wout"], fused["bout"])


# ------------------------------ pure-JAX reference --------------------------------
def ref_forward(ids, attention_mask, params):
    emb = params["emb"][ids].astype(jnp.float32)       # (B, L, E)
    mask = attention_mask.astype(jnp.float32)          # (B, L)
    h = HID

    def run(wih, whh, b, reverse):
        hs = jnp.zeros((B, h), jnp.float32)
        cs = jnp.zeros((B, h), jnp.float32)
        acc = jnp.zeros((B, h), jnp.float32)
        order = range(L - 1, -1, -1) if reverse else range(L)
        for t in order:
            x_t = emb[:, t, :]
            m = mask[:, t:t + 1]
            gates = x_t @ wih + hs @ whh + b
            i_g = jax.nn.sigmoid(gates[:, :h])
            f_g = jax.nn.sigmoid(gates[:, h:2 * h])
            g_g = jnp.tanh(gates[:, 2 * h:3 * h])
            o_g = jax.nn.sigmoid(gates[:, 3 * h:])
            c_new = f_g * cs + i_g * g_g
            h_new = o_g * jnp.tanh(c_new)
            hs = m * h_new + (1.0 - m) * hs
            cs = m * c_new + (1.0 - m) * cs
            acc = acc + m * h_new
        return acc

    sum_f = run(params["wih_f"], params["whh_f"], params["b_f"], False)
    sum_b = run(params["wih_b"], params["whh_b"], params["b_b"], True)
    t_max = jnp.max(jnp.sum(mask, axis=1))
    pooled = jnp.concatenate([sum_f, sum_b], axis=-1) / jnp.maximum(t_max, 1.0)
    wout = jnp.concatenate([params["wout_f"], params["wout_b"]], axis=0)  # (2h, C)
    return pooled @ wout + params["bout"]


# -------------------------------------- main ---------------------------------------
def make_params(key):
    ks = jax.random.split(key, 12)
    stdv = 1.0 / jnp.sqrt(jnp.float32(HID))
    u = lambda k, shp: jax.random.uniform(k, shp, jnp.float32, -stdv, stdv)
    stdl = 1.0 / jnp.sqrt(jnp.float32(2 * HID))
    return {
        "emb":    jax.random.normal(ks[0], (V, E), jnp.float32),
        # forward direction (gate order i, f, g, o like PyTorch); stored transposed
        "wih_f":  u(ks[1], (E, 4 * HID)),
        "whh_f":  u(ks[2], (HID, 4 * HID)),
        "b_f":    (u(ks[3], (1, 4 * HID)) + u(ks[4], (1, 4 * HID))),  # b_ih + b_hh
        # backward direction
        "wih_b":  u(ks[5], (E, 4 * HID)),
        "whh_b":  u(ks[6], (HID, 4 * HID)),
        "b_b":    (u(ks[7], (1, 4 * HID)) + u(ks[8], (1, 4 * HID))),
        # classifier Linear(2h -> C), split into fwd/bwd halves, stored transposed
        "wout_f": jax.random.uniform(ks[9], (HID, C), jnp.float32, -stdl, stdl),
        "wout_b": jax.random.uniform(ks[10], (HID, C), jnp.float32, -stdl, stdl),
        "bout":   jax.random.uniform(ks[11], (1, C), jnp.float32, -stdl, stdl),
    }


if __name__ == "__main__":
    key = jax.random.PRNGKey(0)
    pkey, ikey = jax.random.split(key)
    params = make_params(pkey)
    fused = fuse_params(params)          # one-time, cached; NOT on the per-call hot path

    # deterministic padded token ids + attention mask (lengths 8 and 5)
    lengths = jnp.array([8, 5], dtype=jnp.int32)
    pos = jnp.arange(L)[None, :]
    attention_mask = (pos < lengths[:, None]).astype(jnp.int32)        # (B, L)
    ids = jax.random.randint(ikey, (B, L), 1, V, dtype=jnp.int32)
    ids = ids * attention_mask                                         # 0 = pad token

    logits = bilstm_forward(ids, attention_mask, fused)
    logits = jax.block_until_ready(logits)

    ref = ref_forward(ids, attention_mask, params)
    assert logits.shape == (B, C)
    assert jnp.allclose(logits, ref, rtol=1e-4, atol=1e-4), (
        f"mismatch: {logits} vs {ref}")

    print("KERNEL_OK")
</pallas_src>

<mosaic_0001>
module attributes {stable_mosaic.version = 11 : i64} {
  func.func @bilstm_kernel(%arg0: i32, %arg1: memref<2x8xi32, #tpu.memory_space<smem>>, %arg2: memref<2x8xi32, #tpu.memory_space<vmem>>, %arg3: memref<100x32xf32, #tpu.memory_space<vmem>>, %arg4: memref<64x256xf32, #tpu.memory_space<vmem>>, %arg5: memref<1x256xf32, #tpu.memory_space<vmem>>, %arg6: memref<64x256xf32, #tpu.memory_space<vmem>>, %arg7: memref<64x4xf32, #tpu.memory_space<vmem>>, %arg8: memref<1x4xf32, #tpu.memory_space<vmem>>, %arg9: memref<2x4xf32, #tpu.memory_space<vmem>>, %arg10: memref<16x64xf32, #tpu.memory_space<vmem>>) attributes {dimension_semantics = [#tpu.dimension_semantics<arbitrary>], iteration_bounds = array<i64: 1>, scalar_prefetch = 0 : i64, scratch_operands = 1 : i64, tpu.core_type = #tpu.core_type<tc>, window_params = [{transform_indices = @transform_0, window_bounds = array<i64: 2, 8>}, {pipeline_mode = #tpu.pipeline_mode<synchronous>, transform_indices = @transform_1, window_bounds = array<i64: 2, 8>}, {pipeline_mode = #tpu.pipeline_mode<synchronous>, transform_indices = @transform_2, window_bounds = array<i64: 100, 32>}, {pipeline_mode = #tpu.pipeline_mode<synchronous>, transform_indices = @transform_3, window_bounds = array<i64: 64, 256>}, {pipeline_mode = #tpu.pipeline_mode<synchronous>, transform_indices = @transform_4, window_bounds = array<i64: 1, 256>}, {pipeline_mode = #tpu.pipeline_mode<synchronous>, transform_indices = @transform_5, window_bounds = array<i64: 64, 256>}, {pipeline_mode = #tpu.pipeline_mode<synchronous>, transform_indices = @transform_6, window_bounds = array<i64: 64, 4>}, {pipeline_mode = #tpu.pipeline_mode<synchronous>, transform_indices = @transform_7, window_bounds = array<i64: 1, 4>}, {pipeline_mode = #tpu.pipeline_mode<synchronous>, transform_indices = @transform_8, window_bounds = array<i64: 2, 4>}]} {
    %c0 = arith.constant 0 : index
    %c0_0 = arith.constant 0 : index
    %0 = memref.load %arg1[%c0, %c0_0] : memref<2x8xi32, #tpu.memory_space<smem>>
    %1 = arith.index_cast %0 : i32 to index
    %c0_1 = arith.constant 0 : index
    %2 = vector.load %arg3[%1, %c0_1] : memref<100x32xf32, #tpu.memory_space<vmem>>, vector<1x32xf32>
    %c0_2 = arith.constant 0 : index
    %c0_3 = arith.constant 0 : index
    %3 = vector.load %arg10[%c0_2, %c0_3] : memref<16x64xf32, #tpu.memory_space<vmem>>, vector<1x32xf32>
    tpu.vector_store %arg10[%c0_2, %c0_3], %2 {strides = array<i32>} : memref<16x64xf32, #tpu.memory_space<vmem>>, vector<1x32xf32>,
    %c14 = arith.constant 14 : index
    %c32 = arith.constant 32 : index
    %4 = vector.load %arg10[%c14, %c32] : memref<16x64xf32, #tpu.memory_space<vmem>>, vector<1x32xf32>
    tpu.vector_store %arg10[%c14, %c32], %2 {strides = array<i32>} : memref<16x64xf32, #tpu.memory_space<vmem>>, vector<1x32xf32>,
    %c1 = arith.constant 1 : index
    %c0_4 = arith.constant 0 : index
    %5 = memref.load %arg1[%c1, %c0_4] : memref<2x8xi32, #tpu.memory_space<smem>>
    %6 = arith.index_cast %5 : i32 to index
    %c0_5 = arith.constant 0 : index
    %7 = vector.load %arg3[%6, %c0_5] : memref<100x32xf32, #tpu.memory_space<vmem>>, vector<1x32xf32>
    %c1_6 = arith.constant 1 : index
    %c0_7 = arith.constant 0 : index
    %8 = vector.load %arg10[%c1_6, %c0_7] : memref<16x64xf32, #tpu.memory_space<vmem>>, vector<1x32xf32>
    tpu.vector_store %arg10[%c1_6, %c0_7], %7 {strides = array<i32>} : memref<16x64xf32, #tpu.memory_space<vmem>>, vector<1x32xf32>,
    %c15 = arith.constant 15 : index
    %c32_8 = arith.constant 32 : index
    %9 = vector.load %arg10[%c15, %c32_8] : memref<16x64xf32, #tpu.memory_space<vmem>>, vector<1x32xf32>
    tpu.vector_store %arg10[%c15, %c32_8], %7 {strides = array<i32>} : memref<16x64xf32, #tpu.memory_space<vmem>>, vector<1x32xf32>,
    %c0_9 = arith.constant 0 : index
    %c1_10 = arith.constant 1 : index
    %10 = memref.load %arg1[%c0_9, %c1_10] : memref<2x8xi32, #tpu.memory_space<smem>>
    %11 = arith.index_cast %10 : i32 to index
    %c0_11 = arith.constant 0 : index
    %12 = vector.load %arg3[%11, %c0_11] : memref<100x32xf32, #tpu.memory_space<vmem>>, vector<1x32xf32>
    %c2 = arith.constant 2 : index
    %c0_12 = arith.constant 0 : index
    %13 = vector.load %arg10[%c2, %c0_12] : memref<16x64xf32, #tpu.memory_space<vmem>>, vector<1x32xf32>
    tpu.vector_store %arg10[%c2, %c0_12], %12 {strides = array<i32>} : memref<16x64xf32, #tpu.memory_space<vmem>>, vector<1x32xf32>,
    %c12 = arith.constant 12 : index
    %c32_13 = arith.constant 32 : index
    %14 = vector.load %arg10[%c12, %c32_13] : memref<16x64xf32, #tpu.memory_space<vmem>>, vector<1x32xf32>
    tpu.vector_store %arg10[%c12, %c32_13], %12 {strides = array<i32>} : memref<16x64xf32, #tpu.memory_space<vmem>>, vector<1x32xf32>,
    %c1_14 = arith.constant 1 : index
    %c1_15 = arith.constant 1 : index
    %15 = memref.load %arg1[%c1_14, %c1_15] : memref<2x8xi32, #tpu.memory_space<smem>>
    %16 = arith.index_cast %15 : i32 to index
    %c0_16 = arith.constant 0 : index
    %17 = vector.load %arg3[%16, %c0_16] : memref<100x32xf32, #tpu.memory_space<vmem>>, vector<1x32xf32>
    %c3 = arith.constant 3 : index
    %c0_17 = arith.constant 0 : index
    %18 = vector.load %arg10[%c3, %c0_17] : memref<16x64xf32, #tpu.memory_space<vmem>>, vector<1x32xf32>
    tpu.vector_store %arg10[%c3, %c0_17], %17 {strides = array<i32>} : memref<16x64xf32, #tpu.memory_space<vmem>>, vector<1x32xf32>,
    %c13 = arith.constant 13 : index
    %c32_18 = arith.constant 32 : index
    %19 = vector.load %arg10[%c13, %c32_18] : memref<16x64xf32, #tpu.memory_space<vmem>>, vector<1x32xf32>
    tpu.vector_store %arg10[%c13, %c32_18], %17 {strides = array<i32>} : memref<16x64xf32, #tpu.memory_space<vmem>>, vector<1x32xf32>,
    %c0_19 = arith.constant 0 : index
    %c2_20 = arith.constant 2 : index
    %20 = memref.load %arg1[%c0_19, %c2_20] : memref<2x8xi32, #tpu.memory_space<smem>>
    %21 = arith.index_cast %20 : i32 to index
    %c0_21 = arith.constant 0 : index
    %22 = vector.load %arg3[%21, %c0_21] : memref<100x32xf32, #tpu.memory_space<vmem>>, vector<1x32xf32>
    %c4 = arith.constant 4 : index
    %c0_22 = arith.constant 0 : index
    %23 = vector.load %arg10[%c4, %c0_22] : memref<16x64xf32, #tpu.memory_space<vmem>>, vector<1x32xf32>
    tpu.vector_store %arg10[%c4, %c0_22], %22 {strides = array<i32>} : memref<16x64xf32, #tpu.memory_space<vmem>>, vector<1x32xf32>,
    %c10 = arith.constant 10 : index
    %c32_23 = arith.constant 32 : index
    %24 = vector.load %arg10[%c10, %c32_23] : memref<16x64xf32, #tpu.memory_space<vmem>>, vector<1x32xf32>
    tpu.vector_store %arg10[%c10, %c32_23], %22 {strides = array<i32>} : memref<16x64xf32, #tpu.memory_space<vmem>>, vector<1x32xf32>,
    %c1_24 = arith.constant 1 : index
    %c2_25 = arith.constant 2 : index
    %25 = memref.load %arg1[%c1_24, %c2_25] : memref<2x8xi32, #tpu.memory_space<smem>>
    %26 = arith.index_cast %25 : i32 to index
    %c0_26 = arith.constant 0 : index
    %27 = vector.load %arg3[%26, %c0_26] : memref<100x32xf32, #tpu.memory_space<vmem>>, vector<1x32xf32>
    %c5 = arith.constant 5 : index
    %c0_27 = arith.constant 0 : index
    %28 = vector.load %arg10[%c5, %c0_27] : memref<16x64xf32, #tpu.memory_space<vmem>>, vector<1x32xf32>
    tpu.vector_store %arg10[%c5, %c0_27], %27 {strides = array<i32>} : memref<16x64xf32, #tpu.memory_space<vmem>>, vector<1x32xf32>,
    %c11 = arith.constant 11 : index
    %c32_28 = arith.constant 32 : index
    %29 = vector.load %arg10[%c11, %c32_28] : memref<16x64xf32, #tpu.memory_space<vmem>>, vector<1x32xf32>
    tpu.vector_store %arg10[%c11, %c32_28], %27 {strides = array<i32>} : memref<16x64xf32, #tpu.memory_space<vmem>>, vector<1x32xf32>,
    %c0_29 = arith.constant 0 : index
    %c3_30 = arith.constant 3 : index
    %30 = memref.load %arg1[%c0_29, %c3_30] : memref<2x8xi32, #tpu.memory_space<smem>>
    %31 = arith.index_cast %30 : i32 to index
    %c0_31 = arith.constant 0 : index
    %32 = vector.load %arg3[%31, %c0_31] : memref<100x32xf32, #tpu.memory_space<vmem>>, vector<1x32xf32>
    %c6 = arith.constant 6 : index
    %c0_32 = arith.constant 0 : index
    %33 = vector.load %arg10[%c6, %c0_32] : memref<16x64xf32, #tpu.memory_space<vmem>>, vector<1x32xf32>
    tpu.vector_store %arg10[%c6, %c0_32], %32 {strides = array<i32>} : memref<16x64xf32, #tpu.memory_space<vmem>>, vector<1x32xf32>,
    %c8 = arith.constant 8 : index
    %c32_33 = arith.constant 32 : index
    %34 = vector.load %arg10[%c8, %c32_33] : memref<16x64xf32, #tpu.memory_space<vmem>>, vector<1x32xf32>
    tpu.vector_store %arg10[%c8, %c32_33], %32 {strides = array<i32>} : memref<16x64xf32, #tpu.memory_space<vmem>>, vector<1x32xf32>,
    %c1_34 = arith.constant 1 : index
    %c3_35 = arith.constant 3 : index
    %35 = memref.load %arg1[%c1_34, %c3_35] : memref<2x8xi32, #tpu.memory_space<smem>>
    %36 = arith.index_cast %35 : i32 to index
    %c0_36 = arith.constant 0 : index
    %37 = vector.load %arg3[%36, %c0_36] : memref<100x32xf32, #tpu.memory_space<vmem>>, vector<1x32xf32>
    %c7 = arith.constant 7 : index
    %c0_37 = arith.constant 0 : index
    %38 = vector.load %arg10[%c7, %c0_37] : memref<16x64xf32, #tpu.memory_space<vmem>>, vector<1x32xf32>
    tpu.vector_store %arg10[%c7, %c0_37], %37 {strides = array<i32>} : memref<16x64xf32, #tpu.memory_space<vmem>>, vector<1x32xf32>,
    %c9 = arith.constant 9 : index
    %c32_38 = arith.constant 32 : index
    %39 = vector.load %arg10[%c9, %c32_38] : memref<16x64xf32, #tpu.memory_space<vmem>>, vector<1x32xf32>
    tpu.vector_store %arg10[%c9, %c32_38], %37 {strides = array<i32>} : memref<16x64xf32, #tpu.memory_space<vmem>>, vector<1x32xf32>,
    %c0_39 = arith.constant 0 : index
    %c4_40 = arith.constant 4 : index
    %40 = memref.load %arg1[%c0_39, %c4_40] : memref<2x8xi32, #tpu.memory_space<smem>>
    %41 = arith.index_cast %40 : i32 to index
    %c0_41 = arith.constant 0 : index
    %42 = vector.load %arg3[%41, %c0_41] : memref<100x32xf32, #tpu.memory_space<vmem>>, vector<1x32xf32>
    %c8_42 = arith.constant 8 : index
    %c0_43 = arith.constant 0 : index
    %43 = vector.load %arg10[%c8_42, %c0_43] : memref<16x64xf32, #tpu.memory_space<vmem>>, vector<1x32xf32>
    tpu.vector_store %arg10[%c8_42, %c0_43], %42 {strides = array<i32>} : memref<16x64xf32, #tpu.memory_space<vmem>>, vector<1x32xf32>,
    %c6_44 = arith.constant 6 : index
    %c32_45 = arith.constant 32 : index
    %44 = vector.load %arg10[%c6_44, %c32_45] : memref<16x64xf32, #tpu.memory_space<vmem>>, vector<1x32xf32>
    tpu.vector_store %arg10[%c6_44, %c32_45], %42 {strides = array<i32>} : memref<16x64xf32, #tpu.memory_space<vmem>>, vector<1x32xf32>,
    %c1_46 = arith.constant 1 : index
    %c4_47 = arith.constant 4 : index
    %45 = memref.load %arg1[%c1_46, %c4_47] : memref<2x8xi32, #tpu.memory_space<smem>>
    %46 = arith.index_cast %45 : i32 to index
    %c0_48 = arith.constant 0 : index
    %47 = vector.load %arg3[%46, %c0_48] : memref<100x32xf32, #tpu.memory_space<vmem>>, vector<1x32xf32>
    %c9_49 = arith.constant 9 : index
    %c0_50 = arith.constant 0 : index
    %48 = vector.load %arg10[%c9_49, %c0_50] : memref<16x64xf32, #tpu.memory_space<vmem>>, vector<1x32xf32>
    tpu.vector_store %arg10[%c9_49, %c0_50], %47 {strides = array<i32>} : memref<16x64xf32, #tpu.memory_space<vmem>>, vector<1x32xf32>,
    %c7_51 = arith.constant 7 : index
    %c32_52 = arith.constant 32 : index
    %49 = vector.load %arg10[%c7_51, %c32_52] : memref<16x64xf32, #tpu.memory_space<vmem>>, vector<1x32xf32>
    tpu.vector_store %arg10[%c7_51, %c32_52], %47 {strides = array<i32>} : memref<16x64xf32, #tpu.memory_space<vmem>>, vector<1x32xf32>,
    %c0_53 = arith.constant 0 : index
    %c5_54 = arith.constant 5 : index
    %50 = memref.load %arg1[%c0_53, %c5_54] : memref<2x8xi32, #tpu.memory_space<smem>>
    %51 = arith.index_cast %50 : i32 to index
    %c0_55 = arith.constant 0 : index
    %52 = vector.load %arg3[%51, %c0_55] : memref<100x32xf32, #tpu.memory_space<vmem>>, vector<1x32xf32>
    %c10_56 = arith.constant 10 : index
    %c0_57 = arith.constant 0 : index
    %53 = vector.load %arg10[%c10_56, %c0_57] : memref<16x64xf32, #tpu.memory_space<vmem>>, vector<1x32xf32>
    tpu.vector_store %arg10[%c10_56, %c0_57], %52 {strides = array<i32>} : memref<16x64xf32, #tpu.memory_space<vmem>>, vector<1x32xf32>,
    %c4_58 = arith.constant 4 : index
    %c32_59 = arith.constant 32 : index
    %54 = vector.load %arg10[%c4_58, %c32_59] : memref<16x64xf32, #tpu.memory_space<vmem>>, vector<1x32xf32>
    tpu.vector_store %arg10[%c4_58, %c32_59], %52 {strides = array<i32>} : memref<16x64xf32, #tpu.memory_space<vmem>>, vector<1x32xf32>,
    %c1_60 = arith.constant 1 : index
    %c5_61 = arith.constant 5 : index
    %55 = memref.load %arg1[%c1_60, %c5_61] : memref<2x8xi32, #tpu.memory_space<smem>>
    %56 = arith.index_cast %55 : i32 to index
    %c0_62 = arith.constant 0 : index
    %57 = vector.load %arg3[%56, %c0_62] : memref<100x32xf32, #tpu.memory_space<vmem>>, vector<1x32xf32>
    %c11_63 = arith.constant 11 : index
    %c0_64 = arith.constant 0 : index
    %58 = vector.load %arg10[%c11_63, %c0_64] : memref<16x64xf32, #tpu.memory_space<vmem>>, vector<1x32xf32>
    tpu.vector_store %arg10[%c11_63, %c0_64], %57 {strides = array<i32>} : memref<16x64xf32, #tpu.memory_space<vmem>>, vector<1x32xf32>,
    %c5_65 = arith.constant 5 : index
    %c32_66 = arith.constant 32 : index
    %59 = vector.load %arg10[%c5_65, %c32_66] : memref<16x64xf32, #tpu.memory_space<vmem>>, vector<1x32xf32>
    tpu.vector_store %arg10[%c5_65, %c32_66], %57 {strides = array<i32>} : memref<16x64xf32, #tpu.memory_space<vmem>>, vector<1x32xf32>,
    %c0_67 = arith.constant 0 : index
    %c6_68 = arith.constant 6 : index
    %60 = memref.load %arg1[%c0_67, %c6_68] : memref<2x8xi32, #tpu.memory_space<smem>>
    %61 = arith.index_cast %60 : i32 to index
    %c0_69 = arith.constant 0 : index
    %62 = vector.load %arg3[%61, %c0_69] : memref<100x32xf32, #tpu.memory_space<vmem>>, vector<1x32xf32>
    %c12_70 = arith.constant 12 : index
    %c0_71 = arith.constant 0 : index
    %63 = vector.load %arg10[%c12_70, %c0_71] : memref<16x64xf32, #tpu.memory_space<vmem>>, vector<1x32xf32>
    tpu.vector_store %arg10[%c12_70, %c0_71], %62 {strides = array<i32>} : memref<16x64xf32, #tpu.memory_space<vmem>>, vector<1x32xf32>,
    %c2_72 = arith.constant 2 : index
    %c32_73 = arith.constant 32 : index
    %64 = vector.load %arg10[%c2_72, %c32_73] : memref<16x64xf32, #tpu.memory_space<vmem>>, vector<1x32xf32>
    tpu.vector_store %arg10[%c2_72, %c32_73], %62 {strides = array<i32>} : memref<16x64xf32, #tpu.memory_space<vmem>>, vector<1x32xf32>,
    %c1_74 = arith.constant 1 : index
    %c6_75 = arith.constant 6 : index
    %65 = memref.load %arg1[%c1_74, %c6_75] : memref<2x8xi32, #tpu.memory_space<smem>>
    %66 = arith.index_cast %65 : i32 to index
    %c0_76 = arith.constant 0 : index
    %67 = vector.load %arg3[%66, %c0_76] : memref<100x32xf32, #tpu.memory_space<vmem>>, vector<1x32xf32>
    %c13_77 = arith.constant 13 : index
    %c0_78 = arith.constant 0 : index
    %68 = vector.load %arg10[%c13_77, %c0_78] : memref<16x64xf32, #tpu.memory_space<vmem>>, vector<1x32xf32>
    tpu.vector_store %arg10[%c13_77, %c0_78], %67 {strides = array<i32>} : memref<16x64xf32, #tpu.memory_space<vmem>>, vector<1x32xf32>,
    %c3_79 = arith.constant 3 : index
    %c32_80 = arith.constant 32 : index
    %69 = vector.load %arg10[%c3_79, %c32_80] : memref<16x64xf32, #tpu.memory_space<vmem>>, vector<1x32xf32>
    tpu.vector_store %arg10[%c3_79, %c32_80], %67 {strides = array<i32>} : memref<16x64xf32, #tpu.memory_space<vmem>>, vector<1x32xf32>,
    %c0_81 = arith.constant 0 : index
    %c7_82 = arith.constant 7 : index
    %70 = memref.load %arg1[%c0_81, %c7_82] : memref<2x8xi32, #tpu.memory_space<smem>>
    %71 = arith.index_cast %70 : i32 to index
    %c0_83 = arith.constant 0 : index
    %72 = vector.load %arg3[%71, %c0_83] : memref<100x32xf32, #tpu.memory_space<vmem>>, vector<1x32xf32>
    %c14_84 = arith.constant 14 : index
    %c0_85 = arith.constant 0 : index
    %73 = vector.load %arg10[%c14_84, %c0_85] : memref<16x64xf32, #tpu.memory_space<vmem>>, vector<1x32xf32>
    tpu.vector_store %arg10[%c14_84, %c0_85], %72 {strides = array<i32>} : memref<16x64xf32, #tpu.memory_space<vmem>>, vector<1x32xf32>,
    %c0_86 = arith.constant 0 : index
    %c32_87 = arith.constant 32 : index
    %74 = vector.load %arg10[%c0_86, %c32_87] : memref<16x64xf32, #tpu.memory_space<vmem>>, vector<1x32xf32>
    tpu.vector_store %arg10[%c0_86, %c32_87], %72 {strides = array<i32>} : memref<16x64xf32, #tpu.memory_space<vmem>>, vector<1x32xf32>,
    %c1_88 = arith.constant 1 : index
    %c7_89 = arith.constant 7 : index
    %75 = memref.load %arg1[%c1_88, %c7_89] : memref<2x8xi32, #tpu.memory_space<smem>>
    %76 = arith.index_cast %75 : i32 to index
    %c0_90 = arith.constant 0 : index
    %77 = vector.load %arg3[%76, %c0_90] : memref<100x32xf32, #tpu.memory_space<vmem>>, vector<1x32xf32>
    %c15_91 = arith.constant 15 : index
    %c0_92 = arith.constant 0 : index
    %78 = vector.load %arg10[%c15_91, %c0_92] : memref<16x64xf32, #tpu.memory_space<vmem>>, vector<1x32xf32>
    tpu.vector_store %arg10[%c15_91, %c0_92], %77 {strides = array<i32>} : memref<16x64xf32, #tpu.memory_space<vmem>>, vector<1x32xf32>,
    %c1_93 = arith.constant 1 : index
    %c32_94 = arith.constant 32 : index
    %79 = vector.load %arg10[%c1_93, %c32_94] : memref<16x64xf32, #tpu.memory_space<vmem>>, vector<1x32xf32>
    tpu.vector_store %arg10[%c1_93, %c32_94], %77 {strides = array<i32>} : memref<16x64xf32, #tpu.memory_space<vmem>>, vector<1x32xf32>,
    %c0_95 = arith.constant 0 : index
    %c0_96 = arith.constant 0 : index
    %80 = vector.load %arg10[%c0_95, %c0_96] : memref<16x64xf32, #tpu.memory_space<vmem>>, vector<16x64xf32>
    %c0_97 = arith.constant 0 : index
    %c0_98 = arith.constant 0 : index
    %81 = vector.load %arg4[%c0_97, %c0_98] : memref<64x256xf32, #tpu.memory_space<vmem>>, vector<64x256xf32>
    %cst = arith.constant dense<0.000000e+00> : vector<16x256xf32>
    %82 = tpu.matmul %80, %81, %cst {dimension_numbers = #tpu.dot_dimension_numbers<[1], [0], [0], [1], [0, 0, 1, 1], [], []>} : vector<16x64xf32>, vector<64x256xf32>, vector<16x256xf32> -> vector<16x256xf32>
    %c0_99 = arith.constant 0 : index
    %c0_100 = arith.constant 0 : index
    %83 = vector.load %arg5[%c0_99, %c0_100] : memref<1x256xf32, #tpu.memory_space<vmem>>, vector<1x256xf32>
    %84 = vector.broadcast %83 : vector<1x256xf32> to vector<16x256xf32>
    %85 = arith.addf %82, %84 : vector<16x256xf32>
    %c0_101 = arith.constant 0 : index
    %c0_102 = arith.constant 0 : index
    %86 = vector.load %arg2[%c0_101, %c0_102] : memref<2x8xi32, #tpu.memory_space<vmem>>, vector<2x8xi32>
    %87 = arith.sitofp %86 : vector<2x8xi32> to vector<2x8xf32>
    %c0_103 = arith.constant 0 : index
    %c0_104 = arith.constant 0 : index
    %88 = vector.load %arg6[%c0_103, %c0_104] : memref<64x256xf32, #tpu.memory_space<vmem>>, vector<64x256xf32>
    %cst_105 = arith.constant 0.000000e+00 : f32
    %89 = vector.broadcast %cst_105 : f32 to vector<2x64xf32>
    %cst_106 = arith.constant 0.000000e+00 : f32
    %90 = vector.broadcast %cst_106 : f32 to vector<2x64xf32>
    %cst_107 = arith.constant 0.000000e+00 : f32
    %91 = vector.broadcast %cst_107 : f32 to vector<2x64xf32>
    %92 = vector.extract_strided_slice %85 {offsets = [0, 0], sizes = [2, 256], strides = [1, 1]} : vector<16x256xf32> to vector<2x256xf32>
    %cst_108 = arith.constant dense<0.000000e+00> : vector<2x256xf32>
    %93 = tpu.matmul %89, %88, %cst_108 {dimension_numbers = #tpu.dot_dimension_numbers<[1], [0], [0], [1], [0, 0, 1, 1], [], []>} : vector<2x64xf32>, vector<64x256xf32>, vector<2x256xf32> -> vector<2x256xf32>
    %94 = arith.addf %92, %93 : vector<2x256xf32>
    %95 = vector.extract_strided_slice %94 {offsets = [0, 0], sizes = [2, 192], strides = [1, 1]} : vector<2x256xf32> to vector<2x192xf32>
    %96 = arith.negf %95 : vector<2x192xf32>
    %97 = math.exp %96 : vector<2x192xf32>
    %cst_109 = arith.constant 1.000000e+00 : f32
    %98 = vector.broadcast %cst_109 : f32 to vector<2x192xf32>
    %99 = arith.addf %98, %97 : vector<2x192xf32>
    %100 = arith.divf %98, %99 : vector<2x192xf32>
    %101 = vector.extract_strided_slice %94 {offsets = [0, 192], sizes = [2, 64], strides = [1, 1]} : vector<2x256xf32> to vector<2x64xf32>
    %102 = math.tanh %101 : vector<2x64xf32>
    %103 = vector.extract_strided_slice %100 {offsets = [0, 0], sizes = [2, 64], strides = [1, 1]} : vector<2x192xf32> to vector<2x64xf32>
    %104 = vector.extract_strided_slice %100 {offsets = [0, 64], sizes = [2, 64], strides = [1, 1]} : vector<2x192xf32> to vector<2x64xf32>
    %105 = vector.extract_strided_slice %100 {offsets = [0, 128], sizes = [2, 64], strides = [1, 1]} : vector<2x192xf32> to vector<2x64xf32>
    %106 = arith.mulf %104, %90 : vector<2x64xf32>
    %107 = arith.mulf %103, %102 : vector<2x64xf32>
    %108 = arith.addf %106, %107 : vector<2x64xf32>
    %109 = math.tanh %108 : vector<2x64xf32>
    %110 = arith.mulf %105, %109 : vector<2x64xf32>
    %111 = vector.extract_strided_slice %87 {offsets = [0, 0], sizes = [2, 1], strides = [1, 1]} : vector<2x8xf32> to vector<2x1xf32>
    %112 = vector.extract_strided_slice %87 {offsets = [0, 7], sizes = [2, 1], strides = [1, 1]} : vector<2x8xf32> to vector<2x1xf32>
    %113 = vector.shape_cast %111 : vector<2x1xf32> to vector<2x1xf32>
    %114 = vector.broadcast %113 : vector<2x1xf32> to vector<2x32xf32>
    %115 = vector.shape_cast %112 : vector<2x1xf32> to vector<2x1xf32>
    %116 = vector.broadcast %115 : vector<2x1xf32> to vector<2x32xf32>
    %117 = tpu.concatenate %114, %116 in 1 : vector<2x32xf32>, vector<2x32xf32> -> vector<2x64xf32>
    %118 = arith.mulf %117, %110 : vector<2x64xf32>
    %119 = arith.addf %91, %118 : vector<2x64xf32>
    %120 = arith.subf %110, %89 : vector<2x64xf32>
    %121 = arith.mulf %117, %120 : vector<2x64xf32>
    %122 = arith.addf %89, %121 : vector<2x64xf32>
    %123 = arith.subf %108, %90 : vector<2x64xf32>
    %124 = arith.mulf %117, %123 : vector<2x64xf32>
    %125 = arith.addf %90, %124 : vector<2x64xf32>
    %126 = vector.extract_strided_slice %85 {offsets = [2, 0], sizes = [2, 256], strides = [1, 1]} : vector<16x256xf32> to vector<2x256xf32>
    %cst_110 = arith.constant dense<0.000000e+00> : vector<2x256xf32>
    %127 = tpu.matmul %122, %88, %cst_110 {dimension_numbers = #tpu.dot_dimension_numbers<[1], [0], [0], [1], [0, 0, 1, 1], [], []>} : vector<2x64xf32>, vector<64x256xf32>, vector<2x256xf32> -> vector<2x256xf32>
    %128 = arith.addf %126, %127 : vector<2x256xf32>
    %129 = vector.extract_strided_slice %128 {offsets = [0, 0], sizes = [2, 192], strides = [1, 1]} : vector<2x256xf32> to vector<2x192xf32>
    %130 = arith.negf %129 : vector<2x192xf32>
    %131 = math.exp %130 : vector<2x192xf32>
    %cst_111 = arith.constant 1.000000e+00 : f32
    %132 = vector.broadcast %cst_111 : f32 to vector<2x192xf32>
    %133 = arith.addf %132, %131 : vector<2x192xf32>
    %134 = arith.divf %132, %133 : vector<2x192xf32>
    %135 = vector.extract_strided_slice %128 {offsets = [0, 192], sizes = [2, 64], strides = [1, 1]} : vector<2x256xf32> to vector<2x64xf32>
    %136 = math.tanh %135 : vector<2x64xf32>
    %137 = vector.extract_strided_slice %134 {offsets = [0, 0], sizes = [2, 64], strides = [1, 1]} : vector<2x192xf32> to vector<2x64xf32>
    %138 = vector.extract_strided_slice %134 {offsets = [0, 64], sizes = [2, 64], strides = [1, 1]} : vector<2x192xf32> to vector<2x64xf32>
    %139 = vector.extract_strided_slice %134 {offsets = [0, 128], sizes = [2, 64], strides = [1, 1]} : vector<2x192xf32> to vector<2x64xf32>
    %140 = arith.mulf %138, %125 : vector<2x64xf32>
    %141 = arith.mulf %137, %136 : vector<2x64xf32>
    %142 = arith.addf %140, %141 : vector<2x64xf32>
    %143 = math.tanh %142 : vector<2x64xf32>
    %144 = arith.mulf %139, %143 : vector<2x64xf32>
    %145 = vector.extract_strided_slice %87 {offsets = [0, 1], sizes = [2, 1], strides = [1, 1]} : vector<2x8xf32> to vector<2x1xf32>
    %146 = vector.extract_strided_slice %87 {offsets = [0, 6], sizes = [2, 1], strides = [1, 1]} : vector<2x8xf32> to vector<2x1xf32>
    %147 = vector.shape_cast %145 : vector<2x1xf32> to vector<2x1xf32>
    %148 = vector.broadcast %147 : vector<2x1xf32> to vector<2x32xf32>
    %149 = vector.shape_cast %146 : vector<2x1xf32> to vector<2x1xf32>
    %150 = vector.broadcast %149 : vector<2x1xf32> to vector<2x32xf32>
    %151 = tpu.concatenate %148, %150 in 1 : vector<2x32xf32>, vector<2x32xf32> -> vector<2x64xf32>
    %152 = arith.mulf %151, %144 : vector<2x64xf32>
    %153 = arith.addf %119, %152 : vector<2x64xf32>
    %154 = arith.subf %144, %122 : vector<2x64xf32>
    %155 = arith.mulf %151, %154 : vector<2x64xf32>
    %156 = arith.addf %122, %155 : vector<2x64xf32>
    %157 = arith.subf %142, %125 : vector<2x64xf32>
    %158 = arith.mulf %151, %157 : vector<2x64xf32>
    %159 = arith.addf %125, %158 : vector<2x64xf32>
    %160 = vector.extract_strided_slice %85 {offsets = [4, 0], sizes = [2, 256], strides = [1, 1]} : vector<16x256xf32> to vector<2x256xf32>
    %cst_112 = arith.constant dense<0.000000e+00> : vector<2x256xf32>
    %161 = tpu.matmul %156, %88, %cst_112 {dimension_numbers = #tpu.dot_dimension_numbers<[1], [0], [0], [1], [0, 0, 1, 1], [], []>} : vector<2x64xf32>, vector<64x256xf32>, vector<2x256xf32> -> vector<2x256xf32>
    %162 = arith.addf %160, %161 : vector<2x256xf32>
    %163 = vector.extract_strided_slice %162 {offsets = [0, 0], sizes = [2, 192], strides = [1, 1]} : vector<2x256xf32> to vector<2x192xf32>
    %164 = arith.negf %163 : vector<2x192xf32>
    %165 = math.exp %164 : vector<2x192xf32>
    %cst_113 = arith.constant 1.000000e+00 : f32
    %166 = vector.broadcast %cst_113 : f32 to vector<2x192xf32>
    %167 = arith.addf %166, %165 : vector<2x192xf32>
    %168 = arith.divf %166, %167 : vector<2x192xf32>
    %169 = vector.extract_strided_slice %162 {offsets = [0, 192], sizes = [2, 64], strides = [1, 1]} : vector<2x256xf32> to vector<2x64xf32>
    %170 = math.tanh %169 : vector<2x64xf32>
    %171 = vector.extract_strided_slice %168 {offsets = [0, 0], sizes = [2, 64], strides = [1, 1]} : vector<2x192xf32> to vector<2x64xf32>
    %172 = vector.extract_strided_slice %168 {offsets = [0, 64], sizes = [2, 64], strides = [1, 1]} : vector<2x192xf32> to vector<2x64xf32>
    %173 = vector.extract_strided_slice %168 {offsets = [0, 128], sizes = [2, 64], strides = [1, 1]} : vector<2x192xf32> to vector<2x64xf32>
    %174 = arith.mulf %172, %159 : vector<2x64xf32>
    %175 = arith.mulf %171, %170 : vector<2x64xf32>
    %176 = arith.addf %174, %175 : vector<2x64xf32>
    %177 = math.tanh %176 : vector<2x64xf32>
    %178 = arith.mulf %173, %177 : vector<2x64xf32>
    %179 = vector.extract_strided_slice %87 {offsets = [0, 2], sizes = [2, 1], strides = [1, 1]} : vector<2x8xf32> to vector<2x1xf32>
    %180 = vector.extract_strided_slice %87 {offsets = [0, 5], sizes = [2, 1], strides = [1, 1]} : vector<2x8xf32> to vector<2x1xf32>
    %181 = vector.shape_cast %179 : vector<2x1xf32> to vector<2x1xf32>
    %182 = vector.broadcast %181 : vector<2x1xf32> to vector<2x32xf32>
    %183 = vector.shape_cast %180 : vector<2x1xf32> to vector<2x1xf32>
    %184 = vector.broadcast %183 : vector<2x1xf32> to vector<2x32xf32>
    %185 = tpu.concatenate %182, %184 in 1 : vector<2x32xf32>, vector<2x32xf32> -> vector<2x64xf32>
    %186 = arith.mulf %185, %178 : vector<2x64xf32>
    %187 = arith.addf %153, %186 : vector<2x64xf32>
    %188 = arith.subf %178, %156 : vector<2x64xf32>
    %189 = arith.mulf %185, %188 : vector<2x64xf32>
    %190 = arith.addf %156, %189 : vector<2x64xf32>
    %191 = arith.subf %176, %159 : vector<2x64xf32>
    %192 = arith.mulf %185, %191 : vector<2x64xf32>
    %193 = arith.addf %159, %192 : vector<2x64xf32>
    %194 = vector.extract_strided_slice %85 {offsets = [6, 0], sizes = [2, 256], strides = [1, 1]} : vector<16x256xf32> to vector<2x256xf32>
    %cst_114 = arith.constant dense<0.000000e+00> : vector<2x256xf32>
    %195 = tpu.matmul %190, %88, %cst_114 {dimension_numbers = #tpu.dot_dimension_numbers<[1], [0], [0], [1], [0, 0, 1, 1], [], []>} : vector<2x64xf32>, vector<64x256xf32>, vector<2x256xf32> -> vector<2x256xf32>
    %196 = arith.addf %194, %195 : vector<2x256xf32>
    %197 = vector.extract_strided_slice %196 {offsets = [0, 0], sizes = [2, 192], strides = [1, 1]} : vector<2x256xf32> to vector<2x192xf32>
    %198 = arith.negf %197 : vector<2x192xf32>
    %199 = math.exp %198 : vector<2x192xf32>
    %cst_115 = arith.constant 1.000000e+00 : f32
    %200 = vector.broadcast %cst_115 : f32 to vector<2x192xf32>
    %201 = arith.addf %200, %199 : vector<2x192xf32>
    %202 = arith.divf %200, %201 : vector<2x192xf32>
    %203 = vector.extract_strided_slice %196 {offsets = [0, 192], sizes = [2, 64], strides = [1, 1]} : vector<2x256xf32> to vector<2x64xf32>
    %204 = math.tanh %203 : vector<2x64xf32>
    %205 = vector.extract_strided_slice %202 {offsets = [0, 0], sizes = [2, 64], strides = [1, 1]} : vector<2x192xf32> to vector<2x64xf32>
    %206 = vector.extract_strided_slice %202 {offsets = [0, 64], sizes = [2, 64], strides = [1, 1]} : vector<2x192xf32> to vector<2x64xf32>
    %207 = vector.extract_strided_slice %202 {offsets = [0, 128], sizes = [2, 64], strides = [1, 1]} : vector<2x192xf32> to vector<2x64xf32>
    %208 = arith.mulf %206, %193 : vector<2x64xf32>
    %209 = arith.mulf %205, %204 : vector<2x64xf32>
    %210 = arith.addf %208, %209 : vector<2x64xf32>
    %211 = math.tanh %210 : vector<2x64xf32>
    %212 = arith.mulf %207, %211 : vector<2x64xf32>
    %213 = vector.extract_strided_slice %87 {offsets = [0, 3], sizes = [2, 1], strides = [1, 1]} : vector<2x8xf32> to vector<2x1xf32>
    %214 = vector.extract_strided_slice %87 {offsets = [0, 4], sizes = [2, 1], strides = [1, 1]} : vector<2x8xf32> to vector<2x1xf32>
    %215 = vector.shape_cast %213 : vector<2x1xf32> to vector<2x1xf32>
    %216 = vector.broadcast %215 : vector<2x1xf32> to vector<2x32xf32>
    %217 = vector.shape_cast %214 : vector<2x1xf32> to vector<2x1xf32>
    %218 = vector.broadcast %217 : vector<2x1xf32> to vector<2x32xf32>
    %219 = tpu.concatenate %216, %218 in 1 : vector<2x32xf32>, vector<2x32xf32> -> vector<2x64xf32>
    %220 = arith.mulf %219, %212 : vector<2x64xf32>
    %221 = arith.addf %187, %220 : vector<2x64xf32>
    %222 = arith.subf %212, %190 : vector<2x64xf32>
    %223 = arith.mulf %219, %222 : vector<2x64xf32>
    %224 = arith.addf %190, %223 : vector<2x64xf32>
    %225 = arith.subf %210, %193 : vector<2x64xf32>
    %226 = arith.mulf %219, %225 : vector<2x64xf32>
    %227 = arith.addf %193, %226 : vector<2x64xf32>
    %228 = vector.extract_strided_slice %85 {offsets = [8, 0], sizes = [2, 256], strides = [1, 1]} : vector<16x256xf32> to vector<2x256xf32>
    %cst_116 = arith.constant dense<0.000000e+00> : vector<2x256xf32>
    %229 = tpu.matmul %224, %88, %cst_116 {dimension_numbers = #tpu.dot_dimension_numbers<[1], [0], [0], [1], [0, 0, 1, 1], [], []>} : vector<2x64xf32>, vector<64x256xf32>, vector<2x256xf32> -> vector<2x256xf32>
    %230 = arith.addf %228, %229 : vector<2x256xf32>
    %231 = vector.extract_strided_slice %230 {offsets = [0, 0], sizes = [2, 192], strides = [1, 1]} : vector<2x256xf32> to vector<2x192xf32>
    %232 = arith.negf %231 : vector<2x192xf32>
    %233 = math.exp %232 : vector<2x192xf32>
    %cst_117 = arith.constant 1.000000e+00 : f32
    %234 = vector.broadcast %cst_117 : f32 to vector<2x192xf32>
    %235 = arith.addf %234, %233 : vector<2x192xf32>
    %236 = arith.divf %234, %235 : vector<2x192xf32>
    %237 = vector.extract_strided_slice %230 {offsets = [0, 192], sizes = [2, 64], strides = [1, 1]} : vector<2x256xf32> to vector<2x64xf32>
    %238 = math.tanh %237 : vector<2x64xf32>
    %239 = vector.extract_strided_slice %236 {offsets = [0, 0], sizes = [2, 64], strides = [1, 1]} : vector<2x192xf32> to vector<2x64xf32>
    %240 = vector.extract_strided_slice %236 {offsets = [0, 64], sizes = [2, 64], strides = [1, 1]} : vector<2x192xf32> to vector<2x64xf32>
    %241 = vector.extract_strided_slice %236 {offsets = [0, 128], sizes = [2, 64], strides = [1, 1]} : vector<2x192xf32> to vector<2x64xf32>
    %242 = arith.mulf %240, %227 : vector<2x64xf32>
    %243 = arith.mulf %239, %238 : vector<2x64xf32>
    %244 = arith.addf %242, %243 : vector<2x64xf32>
    %245 = math.tanh %244 : vector<2x64xf32>
    %246 = arith.mulf %241, %245 : vector<2x64xf32>
    %247 = vector.extract_strided_slice %87 {offsets = [0, 4], sizes = [2, 1], strides = [1, 1]} : vector<2x8xf32> to vector<2x1xf32>
    %248 = vector.extract_strided_slice %87 {offsets = [0, 3], sizes = [2, 1], strides = [1, 1]} : vector<2x8xf32> to vector<2x1xf32>
    %249 = vector.shape_cast %247 : vector<2x1xf32> to vector<2x1xf32>
    %250 = vector.broadcast %249 : vector<2x1xf32> to vector<2x32xf32>
    %251 = vector.shape_cast %248 : vector<2x1xf32> to vector<2x1xf32>
    %252 = vector.broadcast %251 : vector<2x1xf32> to vector<2x32xf32>
    %253 = tpu.concatenate %250, %252 in 1 : vector<2x32xf32>, vector<2x32xf32> -> vector<2x64xf32>
    %254 = arith.mulf %253, %246 : vector<2x64xf32>
    %255 = arith.addf %221, %254 : vector<2x64xf32>
    %256 = arith.subf %246, %224 : vector<2x64xf32>
    %257 = arith.mulf %253, %256 : vector<2x64xf32>
    %258 = arith.addf %224, %257 : vector<2x64xf32>
    %259 = arith.subf %244, %227 : vector<2x64xf32>
    %260 = arith.mulf %253, %259 : vector<2x64xf32>
    %261 = arith.addf %227, %260 : vector<2x64xf32>
    %262 = vector.extract_strided_slice %85 {offsets = [10, 0], sizes = [2, 256], strides = [1, 1]} : vector<16x256xf32> to vector<2x256xf32>
    %cst_118 = arith.constant dense<0.000000e+00> : vector<2x256xf32>
    %263 = tpu.matmul %258, %88, %cst_118 {dimension_numbers = #tpu.dot_dimension_numbers<[1], [0], [0], [1], [0, 0, 1, 1], [], []>} : vector<2x64xf32>, vector<64x256xf32>, vector<2x256xf32> -> vector<2x256xf32>
    %264 = arith.addf %262, %263 : vector<2x256xf32>
    %265 = vector.extract_strided_slice %264 {offsets = [0, 0], sizes = [2, 192], strides = [1, 1]} : vector<2x256xf32> to vector<2x192xf32>
    %266 = arith.negf %265 : vector<2x192xf32>
    %267 = math.exp %266 : vector<2x192xf32>
    %cst_119 = arith.constant 1.000000e+00 : f32
    %268 = vector.broadcast %cst_119 : f32 to vector<2x192xf32>
    %269 = arith.addf %268, %267 : vector<2x192xf32>
    %270 = arith.divf %268, %269 : vector<2x192xf32>
    %271 = vector.extract_strided_slice %264 {offsets = [0, 192], sizes = [2, 64], strides = [1, 1]} : vector<2x256xf32> to vector<2x64xf32>
    %272 = math.tanh %271 : vector<2x64xf32>
    %273 = vector.extract_strided_slice %270 {offsets = [0, 0], sizes = [2, 64], strides = [1, 1]} : vector<2x192xf32> to vector<2x64xf32>
    %274 = vector.extract_strided_slice %270 {offsets = [0, 64], sizes = [2, 64], strides = [1, 1]} : vector<2x192xf32> to vector<2x64xf32>
    %275 = vector.extract_strided_slice %270 {offsets = [0, 128], sizes = [2, 64], strides = [1, 1]} : vector<2x192xf32> to vector<2x64xf32>
    %276 = arith.mulf %274, %261 : vector<2x64xf32>
    %277 = arith.mulf %273, %272 : vector<2x64xf32>
    %278 = arith.addf %276, %277 : vector<2x64xf32>
    %279 = math.tanh %278 : vector<2x64xf32>
    %280 = arith.mulf %275, %279 : vector<2x64xf32>
    %281 = vector.extract_strided_slice %87 {offsets = [0, 5], sizes = [2, 1], strides = [1, 1]} : vector<2x8xf32> to vector<2x1xf32>
    %282 = vector.extract_strided_slice %87 {offsets = [0, 2], sizes = [2, 1], strides = [1, 1]} : vector<2x8xf32> to vector<2x1xf32>
    %283 = vector.shape_cast %281 : vector<2x1xf32> to vector<2x1xf32>
    %284 = vector.broadcast %283 : vector<2x1xf32> to vector<2x32xf32>
    %285 = vector.shape_cast %282 : vector<2x1xf32> to vector<2x1xf32>
    %286 = vector.broadcast %285 : vector<2x1xf32> to vector<2x32xf32>
    %287 = tpu.concatenate %284, %286 in 1 : vector<2x32xf32>, vector<2x32xf32> -> vector<2x64xf32>
    %288 = arith.mulf %287, %280 : vector<2x64xf32>
    %289 = arith.addf %255, %288 : vector<2x64xf32>
    %290 = arith.subf %280, %258 : vector<2x64xf32>
    %291 = arith.mulf %287, %290 : vector<2x64xf32>
    %292 = arith.addf %258, %291 : vector<2x64xf32>
    %293 = arith.subf %278, %261 : vector<2x64xf32>
    %294 = arith.mulf %287, %293 : vector<2x64xf32>
    %295 = arith.addf %261, %294 : vector<2x64xf32>
    %296 = vector.extract_strided_slice %85 {offsets = [12, 0], sizes = [2, 256], strides = [1, 1]} : vector<16x256xf32> to vector<2x256xf32>
    %cst_120 = arith.constant dense<0.000000e+00> : vector<2x256xf32>
    %297 = tpu.matmul %292, %88, %cst_120 {dimension_numbers = #tpu.dot_dimension_numbers<[1], [0], [0], [1], [0, 0, 1, 1], [], []>} : vector<2x64xf32>, vector<64x256xf32>, vector<2x256xf32> -> vector<2x256xf32>
    %298 = arith.addf %296, %297 : vector<2x256xf32>
    %299 = vector.extract_strided_slice %298 {offsets = [0, 0], sizes = [2, 192], strides = [1, 1]} : vector<2x256xf32> to vector<2x192xf32>
    %300 = arith.negf %299 : vector<2x192xf32>
    %301 = math.exp %300 : vector<2x192xf32>
    %cst_121 = arith.constant 1.000000e+00 : f32
    %302 = vector.broadcast %cst_121 : f32 to vector<2x192xf32>
    %303 = arith.addf %302, %301 : vector<2x192xf32>
    %304 = arith.divf %302, %303 : vector<2x192xf32>
    %305 = vector.extract_strided_slice %298 {offsets = [0, 192], sizes = [2, 64], strides = [1, 1]} : vector<2x256xf32> to vector<2x64xf32>
    %306 = math.tanh %305 : vector<2x64xf32>
    %307 = vector.extract_strided_slice %304 {offsets = [0, 0], sizes = [2, 64], strides = [1, 1]} : vector<2x192xf32> to vector<2x64xf32>
    %308 = vector.extract_strided_slice %304 {offsets = [0, 64], sizes = [2, 64], strides = [1, 1]} : vector<2x192xf32> to vector<2x64xf32>
    %309 = vector.extract_strided_slice %304 {offsets = [0, 128], sizes = [2, 64], strides = [1, 1]} : vector<2x192xf32> to vector<2x64xf32>
    %310 = arith.mulf %308, %295 : vector<2x64xf32>
    %311 = arith.mulf %307, %306 : vector<2x64xf32>
    %312 = arith.addf %310, %311 : vector<2x64xf32>
    %313 = math.tanh %312 : vector<2x64xf32>
    %314 = arith.mulf %309, %313 : vector<2x64xf32>
    %315 = vector.extract_strided_slice %87 {offsets = [0, 6], sizes = [2, 1], strides = [1, 1]} : vector<2x8xf32> to vector<2x1xf32>
    %316 = vector.extract_strided_slice %87 {offsets = [0, 1], sizes = [2, 1], strides = [1, 1]} : vector<2x8xf32> to vector<2x1xf32>
    %317 = vector.shape_cast %315 : vector<2x1xf32> to vector<2x1xf32>
    %318 = vector.broadcast %317 : vector<2x1xf32> to vector<2x32xf32>
    %319 = vector.shape_cast %316 : vector<2x1xf32> to vector<2x1xf32>
    %320 = vector.broadcast %319 : vector<2x1xf32> to vector<2x32xf32>
    %321 = tpu.concatenate %318, %320 in 1 : vector<2x32xf32>, vector<2x32xf32> -> vector<2x64xf32>
    %322 = arith.mulf %321, %314 : vector<2x64xf32>
    %323 = arith.addf %289, %322 : vector<2x64xf32>
    %324 = arith.subf %314, %292 : vector<2x64xf32>
    %325 = arith.mulf %321, %324 : vector<2x64xf32>
    %326 = arith.addf %292, %325 : vector<2x64xf32>
    %327 = arith.subf %312, %295 : vector<2x64xf32>
    %328 = arith.mulf %321, %327 : vector<2x64xf32>
    %329 = arith.addf %295, %328 : vector<2x64xf32>
    %330 = vector.extract_strided_slice %85 {offsets = [14, 0], sizes = [2, 256], strides = [1, 1]} : vector<16x256xf32> to vector<2x256xf32>
    %cst_122 = arith.constant dense<0.000000e+00> : vector<2x256xf32>
    %331 = tpu.matmul %326, %88, %cst_122 {dimension_numbers = #tpu.dot_dimension_numbers<[1], [0], [0], [1], [0, 0, 1, 1], [], []>} : vector<2x64xf32>, vector<64x256xf32>, vector<2x256xf32> -> vector<2x256xf32>
    %332 = arith.addf %330, %331 : vector<2x256xf32>
    %333 = vector.extract_strided_slice %332 {offsets = [0, 0], sizes = [2, 192], strides = [1, 1]} : vector<2x256xf32> to vector<2x192xf32>
    %334 = arith.negf %333 : vector<2x192xf32>
    %335 = math.exp %334 : vector<2x192xf32>
    %cst_123 = arith.constant 1.000000e+00 : f32
    %336 = vector.broadcast %cst_123 : f32 to vector<2x192xf32>
    %337 = arith.addf %336, %335 : vector<2x192xf32>
    %338 = arith.divf %336, %337 : vector<2x192xf32>
    %339 = vector.extract_strided_slice %332 {offsets = [0, 192], sizes = [2, 64], strides = [1, 1]} : vector<2x256xf32> to vector<2x64xf32>
    %340 = math.tanh %339 : vector<2x64xf32>
    %341 = vector.extract_strided_slice %338 {offsets = [0, 0], sizes = [2, 64], strides = [1, 1]} : vector<2x192xf32> to vector<2x64xf32>
    %342 = vector.extract_strided_slice %338 {offsets = [0, 64], sizes = [2, 64], strides = [1, 1]} : vector<2x192xf32> to vector<2x64xf32>
    %343 = vector.extract_strided_slice %338 {offsets = [0, 128], sizes = [2, 64], strides = [1, 1]} : vector<2x192xf32> to vector<2x64xf32>
    %344 = arith.mulf %342, %329 : vector<2x64xf32>
    %345 = arith.mulf %341, %340 : vector<2x64xf32>
    %346 = arith.addf %344, %345 : vector<2x64xf32>
    %347 = math.tanh %346 : vector<2x64xf32>
    %348 = arith.mulf %343, %347 : vector<2x64xf32>
    %349 = vector.extract_strided_slice %87 {offsets = [0, 7], sizes = [2, 1], strides = [1, 1]} : vector<2x8xf32> to vector<2x1xf32>
    %350 = vector.extract_strided_slice %87 {offsets = [0, 0], sizes = [2, 1], strides = [1, 1]} : vector<2x8xf32> to vector<2x1xf32>
    %351 = vector.shape_cast %349 : vector<2x1xf32> to vector<2x1xf32>
    %352 = vector.broadcast %351 : vector<2x1xf32> to vector<2x32xf32>
    %353 = vector.shape_cast %350 : vector<2x1xf32> to vector<2x1xf32>
    %354 = vector.broadcast %353 : vector<2x1xf32> to vector<2x32xf32>
    %355 = tpu.concatenate %352, %354 in 1 : vector<2x32xf32>, vector<2x32xf32> -> vector<2x64xf32>
    %356 = arith.mulf %355, %348 : vector<2x64xf32>
    %357 = arith.addf %323, %356 : vector<2x64xf32>
    %cst_124 = arith.constant dense<0.000000e+00> : vector<2xf32>
    %358 = vector.multi_reduction <add>, %87, %cst_124 [1] : vector<2x8xf32> to vector<2xf32>
    %359 = vector.shape_cast %358 : vector<2xf32> to vector<2x1xf32>
    %cst_125 = arith.constant dense<0xFF800000> : vector<1xf32>
    %360 = vector.multi_reduction <maximumf>, %359, %cst_125 [0] : vector<2x1xf32> to vector<1xf32>
    %361 = vector.shape_cast %360 : vector<1xf32> to vector<1x1xf32>
    %cst_126 = arith.constant 1.000000e+00 : f32
    %362 = vector.broadcast %cst_126 : f32 to vector<1x1xf32>
    %363 = arith.maximumf %361, %362 : vector<1x1xf32>
    %cst_127 = arith.constant 1.000000e+00 : f32
    %364 = vector.broadcast %cst_127 : f32 to vector<1x1xf32>
    %365 = arith.divf %364, %363 : vector<1x1xf32>
    %c0_128 = arith.constant 0 : index
    %c0_129 = arith.constant 0 : index
    %366 = vector.load %arg7[%c0_128, %c0_129] : memref<64x4xf32, #tpu.memory_space<vmem>>, vector<64x4xf32>
    %cst_130 = arith.constant dense<0.000000e+00> : vector<2x4xf32>
    %367 = tpu.matmul %357, %366, %cst_130 {dimension_numbers = #tpu.dot_dimension_numbers<[1], [0], [0], [1], [0, 0, 1, 1], [], []>} : vector<2x64xf32>, vector<64x4xf32>, vector<2x4xf32> -> vector<2x4xf32>
    %368 = vector.broadcast %365 : vector<1x1xf32> to vector<2x4xf32>
    %369 = arith.mulf %367, %368 : vector<2x4xf32>
    %c0_131 = arith.constant 0 : index
    %c0_132 = arith.constant 0 : index
    %370 = vector.load %arg8[%c0_131, %c0_132] : memref<1x4xf32, #tpu.memory_space<vmem>>, vector<1x4xf32>
    %371 = vector.broadcast %370 : vector<1x4xf32> to vector<2x4xf32>
    %372 = arith.addf %369, %371 : vector<2x4xf32>
    %c0_133 = arith.constant 0 : index
    %c0_134 = arith.constant 0 : index
    %373 = vector.load %arg9[%c0_133, %c0_134] : memref<2x4xf32, #tpu.memory_space<vmem>>, vector<2x4xf32>
    tpu.vector_store %arg9[%c0_133, %c0_134], %372 {strides = array<i32>} : memref<2x4xf32, #tpu.memory_space<vmem>>, vector<2x4xf32>,
    return
  }
  func.func @transform_0(%arg0: i32) -> (i32, i32) {
    %c0_i32 = arith.constant 0 : i32
    %c0_i32_0 = arith.constant 0 : i32
    %c0_i32_1 = arith.constant 0 : i32
    return %c0_i32, %c0_i32_0 : i32, i32
  }
  func.func @transform_1(%arg0: i32) -> (i32, i32) {
    %c0_i32 = arith.constant 0 : i32
    %c0_i32_0 = arith.constant 0 : i32
    %c0_i32_1 = arith.constant 0 : i32
    return %c0_i32, %c0_i32_0 : i32, i32
  }
  func.func @transform_2(%arg0: i32) -> (i32, i32) {
    %c0_i32 = arith.constant 0 : i32
    %c0_i32_0 = arith.constant 0 : i32
    %c0_i32_1 = arith.constant 0 : i32
    return %c0_i32, %c0_i32_0 : i32, i32
  }
  func.func @transform_3(%arg0: i32) -> (i32, i32) {
    %c0_i32 = arith.constant 0 : i32
    %c0_i32_0 = arith.constant 0 : i32
    %c0_i32_1 = arith.constant 0 : i32
    return %c0_i32, %c0_i32_0 : i32, i32
  }
  func.func @transform_4(%arg0: i32) -> (i32, i32) {
    %c0_i32 = arith.constant 0 : i32
    %c0_i32_0 = arith.constant 0 : i32
    %c0_i32_1 = arith.constant 0 : i32
    return %c0_i32, %c0_i32_0 : i32, i32
  }
  func.func @transform_5(%arg0: i32) -> (i32, i32) {
    %c0_i32 = arith.constant 0 : i32
    %c0_i32_0 = arith.constant 0 : i32
    %c0_i32_1 = arith.constant 0 : i32
    return %c0_i32, %c0_i32_0 : i32, i32
  }
  func.func @transform_6(%arg0: i32) -> (i32, i32) {
    %c0_i32 = arith.constant 0 : i32
    %c0_i32_0 = arith.constant 0 : i32
    %c0_i32_1 = arith.constant 0 : i32
    return %c0_i32, %c0_i32_0 : i32, i32
  }
  func.func @transform_7(%arg0: i32) -> (i32, i32) {
    %c0_i32 = arith.constant 0 : i32
    %c0_i32_0 = arith.constant 0 : i32
    %c0_i32_1 = arith.constant 0 : i32
    return %c0_i32, %c0_i32_0 : i32, i32
  }
  func.func @transform_8(%arg0: i32) -> (i32, i32) {
    %c0_i32 = arith.constant 0 : i32
    %c0_i32_0 = arith.constant 0 : i32
    %c0_i32_1 = arith.constant 0 : i32
    return %c0_i32, %c0_i32_0 : i32, i32
  }
}

</mosaic_0001>

<llo_original>
// kernel: tpu_custom_call.1
$region0: #{tpu_custom_call.1}
  #allocation0 [shape = 'u32[]', space=smem, size = 0x4, offset = 0x4, fixed_abs, tag = 'smem constant byte address 0x4 - core index']
  #allocation1 [shape = 'u32[72,128]{1,0:T(1,128)}', space=vmem, size = 0x9000, scoped, tag = 'internal scratch']
  #allocation2 [shape = 'f32[16,64]{1,0:T(8,128)}', space=vmem, size = 0x2000, scoped, tag = 'scratch operand']
  %s0 = inlined_call_operand.vmem [shape: s32[2,8], index: 0, kind: input, shape index: {}]
  %s1 = inlined_call_operand.vmem [shape: s32[2,8], index: 1, kind: input, shape index: {}]
  %s2 = inlined_call_operand.vmem [shape: f32[100,32], index: 2, kind: input, shape index: {}]
  %s3 = inlined_call_operand.vmem [shape: f32[64,256], index: 3, kind: input, shape index: {}]
  %s4 = inlined_call_operand.vmem [shape: f32[1,256], index: 4, kind: input, shape index: {}]
  %s5 = inlined_call_operand.hbm [shape: f32[64,256], index: 5, kind: input, shape index: {}]
  %s6 = inlined_call_operand.vmem [shape: f32[64,4], index: 6, kind: input, shape index: {}]
  %s7 = inlined_call_operand.vmem [shape: f32[1,4], index: 7, kind: input, shape index: {}]
  %s8 = inlined_call_operand.hbm [shape: f32[2,4], index: 8, kind: output, shape index: {}]
  %s9 = sld [smem:[#allocation0]]
  $region50: #{tpu_custom_call.1} parent=0
    _
  %s11 = ssub.s32 1, %s9
  %s12 = scalar_select 0, %s11, %s9
  $region1: #{tpu_custom_call.1} parent=0
    #allocation3 [shape = 'u8[1024]{0}', space=smem, size = 0x400, scoped, tag = 'input window, operand 0, single buffered']
    #allocation4 [shape = 's32[1]{0}', space=sflag, size = 0x4, scoped, tag = 'scoped memory for tpu_custom_call.1']
    #allocation5 [shape = 's32[1]{0}', space=sflag, size = 0x4, scoped, tag = 'scoped memory for tpu_custom_call.1']
    #allocation6 [shape = 's32[1]{0}', space=sflag, size = 0x4, scoped, tag = 'scoped memory for tpu_custom_call.1']
    #allocation7 [shape = 'u8[65536]{0}', space=vmem, size = 0x10000, scoped, tag = 'input window, operand 5, single buffered']
    #allocation8 [shape = 'u8[1024]{0}', space=vmem, size = 0x400, scoped, tag = 'output window, operand 0, single buffered']
    %13 = vsyncpa [#allocation6], 0
    %14 = vsyncpa [#allocation4], 0
    %15 = vsyncpa [#allocation5], 0
    // Predicated region
    $region2: #{tpu_custom_call.1} parent=1 // pred_check
      _
    $region3: #{tpu_custom_call.1} parent=1 // pred_check_branch
      %17 = sbr.rel (0) target = $region5
    $region4: #{tpu_custom_call.1} parent=1 // pred_region
      %19 = vsyncadd [#allocation6], 0
      %s21 = sshll.u32 %s0, 4
      %s22 = int_to_ptr.vmem [resolvable:$true] %s21
      %24 = dma.vmem_to_smem %s22, 32, [#allocation3], [#allocation6]
    $region5: #{tpu_custom_call.1} parent=1 // pred_fallthru
      _
    // Predicated region
    $region6: #{tpu_custom_call.1} parent=1 // pred_check
      _
    $region7: #{tpu_custom_call.1} parent=1 // pred_check_branch
      %26 = sbr.rel (0) target = $region9
    $region8: #{tpu_custom_call.1} parent=1 // pred_region
      _
    $region9: #{tpu_custom_call.1} parent=1 // pred_fallthru
      _
    // Predicated region
    $region10: #{tpu_custom_call.1} parent=1 // pred_check
      _
    $region11: #{tpu_custom_call.1} parent=1 // pred_check_branch
      %28 = sbr.rel (0) target = $region13
    $region12: #{tpu_custom_call.1} parent=1 // pred_region
      _
    $region13: #{tpu_custom_call.1} parent=1 // pred_fallthru
      _
    // Predicated region
    $region14: #{tpu_custom_call.1} parent=1 // pred_check
      _
    $region15: #{tpu_custom_call.1} parent=1 // pred_check_branch
      %30 = sbr.rel (0) target = $region17
    $region16: #{tpu_custom_call.1} parent=1 // pred_region
      _
    $region17: #{tpu_custom_call.1} parent=1 // pred_fallthru
      _
    // Predicated region
    $region18: #{tpu_custom_call.1} parent=1 // pred_check
      _
    $region19: #{tpu_custom_call.1} parent=1 // pred_check_branch
      %32 = sbr.rel (0) target = $region21
    $region20: #{tpu_custom_call.1} parent=1 // pred_region
      _
    $region21: #{tpu_custom_call.1} parent=1 // pred_fallthru
      _
    // Predicated region
    $region22: #{tpu_custom_call.1} parent=1 // pred_check
      _
    $region23: #{tpu_custom_call.1} parent=1 // pred_check_branch
      %34 = sbr.rel (0) target = $region25
    $region24: #{tpu_custom_call.1} parent=1 // pred_region
      %36 = vsyncadd [#allocation4], 0
      %s37 = sshll.u32 %s5, 4
      %s38 = int_to_ptr.hbm [resolvable:$true] %s37
      %s39 = sshll.u32 [#allocation7], 4
      %s40 = int_to_ptr.vmem [resolvable:$true] %s39
      %45 = dma.hbm_to_vmem [thread:$0]  %s38, 2048, %s40, [#allocation4], 256, 256, 16
    $region25: #{tpu_custom_call.1} parent=1 // pred_fallthru
      _
    // Predicated region
    $region26: #{tpu_custom_call.1} parent=1 // pred_check
      _
    $region27: #{tpu_custom_call.1} parent=1 // pred_check_branch
      %47 = sbr.rel (0) target = $region29
    $region28: #{tpu_custom_call.1} parent=1 // pred_region
      _
    $region29: #{tpu_custom_call.1} parent=1 // pred_fallthru
      _
    // Predicated region
    $region30: #{tpu_custom_call.1} parent=1 // pred_check
      _
    $region31: #{tpu_custom_call.1} parent=1 // pred_check_branch
      %49 = sbr.rel (0) target = $region33
    $region32: #{tpu_custom_call.1} parent=1 // pred_region
      _
    $region33: #{tpu_custom_call.1} parent=1 // pred_fallthru
      _
    // Predicated region
    $region34: #{tpu_custom_call.1} parent=1 // pred_check
      _
    $region35: #{tpu_custom_call.1} parent=1 // pred_check_branch
      %51 = sbr.rel (0) target = $region37
    $region36: #{tpu_custom_call.1} parent=1 // pred_region
      %53 = dma.done [#allocation6], 32
    $region37: #{tpu_custom_call.1} parent=1 // pred_fallthru
      _
    // Predicated region
    $region38: #{tpu_custom_call.1} parent=1 // pred_check
      _
    $region39: #{tpu_custom_call.1} parent=1 // pred_check_branch
      %55 = sbr.rel (0) target = $region41
    $region40: #{tpu_custom_call.1} parent=1 // pred_region
      %57 = dma.done [#allocation4], 2048
    $region41: #{tpu_custom_call.1} parent=1 // pred_fallthru
      _
    %58 = sfence
    %s59 = sld [smem:[#allocation3]]
    %s60 = scalar_lea.vmem %s2, %s59
    %v61 = vld [vmem:[%s60] sm:$0x1]
    %vm62 = vcmask 253952
    %63 = vst.msk [vmem:[#allocation2] sm:$0x1] %vm62, %v61
    %65 = vrot.lane.b32.xlu0 %v61, 32
    %v66 = vpop.permute.xlu0 %65
    %vm68 = vcmask 516352
    %69 = vst.msk [vmem:[#allocation2 + $0xe] sm:$0x1] %vm68, %v66
    %s70 = sld [smem:[#allocation3 + $0x80]]
    %s71 = scalar_lea.vmem %s2, %s70
    %v72 = vld [vmem:[%s71] sm:$0x1]
    %73 = vst.msk [vmem:[#allocation2 + $0x1] sm:$0x1] %vm62, %v72
    %75 = vrot.lane.b32.xlu0 %v72, 32
    %v76 = vpop.permute.xlu0 %75
    %78 = vst.msk [vmem:[#allocation2 + $0xf] sm:$0x1] %vm68, %v76
    %s79 = sld [smem:[#allocation3 + $0x1]]
    %s80 = scalar_lea.vmem %s2, %s79
    %v81 = vld [vmem:[%s80] sm:$0x1]
    %82 = vst.msk [vmem:[#allocation2 + $0x2] sm:$0x1] %vm62, %v81
    %84 = vrot.lane.b32.xlu0 %v81, 32
    %v85 = vpop.permute.xlu0 %84
    %87 = vst.msk [vmem:[#allocation2 + $0xc] sm:$0x1] %vm68, %v85
    %s88 = sld [smem:[#allocation3 + $0x81]]
    %s89 = scalar_lea.vmem %s2, %s88
    %v90 = vld [vmem:[%s89] sm:$0x1]
    %91 = vst.msk [vmem:[#allocation2 + $0x3] sm:$0x1] %vm62, %v90
    %93 = vrot.lane.b32.xlu0 %v90, 32
    %v94 = vpop.permute.xlu0 %93
    %96 = vst.msk [vmem:[#allocation2 + $0xd] sm:$0x1] %vm68, %v94
    %s97 = sld [smem:[#allocation3 + $0x2]]
    %s98 = scalar_lea.vmem %s2, %s97
    %v99 = vld [vmem:[%s98] sm:$0x1]
    %100 = vst.msk [vmem:[#allocation2 + $0x4] sm:$0x1] %vm62, %v99
    %102 = vrot.lane.b32.xlu0 %v99, 32
    %v103 = vpop.permute.xlu0 %102
    %105 = vst.msk [vmem:[#allocation2 + $0xa] sm:$0x1] %vm68, %v103
    %s106 = sld [smem:[#allocation3 + $0x82]]
    %s107 = scalar_lea.vmem %s2, %s106
    %v108 = vld [vmem:[%s107] sm:$0x1]
    %109 = vst.msk [vmem:[#allocation2 + $0x5] sm:$0x1] %vm62, %v108
    %111 = vrot.lane.b32.xlu0 %v108, 32
    %v112 = vpop.permute.xlu0 %111
    %114 = vst.msk [vmem:[#allocation2 + $0xb] sm:$0x1] %vm68, %v112
    %s115 = sld [smem:[#allocation3 + $0x3]]
    %s116 = scalar_lea.vmem %s2, %s115
    %v117 = vld [vmem:[%s116] sm:$0x1]
    %118 = vst.msk [vmem:[#allocation2 + $0x6] sm:$0x1] %vm62, %v117
    %120 = vrot.lane.b32.xlu0 %v117, 32
    %v121 = vpop.permute.xlu0 %120
    %123 = vst.msk [vmem:[#allocation2 + $0x8] sm:$0x1] %vm68, %v121
    %s124 = sld [smem:[#allocation3 + $0x83]]
    %s125 = scalar_lea.vmem %s2, %s124
    %v126 = vld [vmem:[%s125] sm:$0x1]
    %127 = vst.msk [vmem:[#allocation2 + $0x7] sm:$0x1] %vm62, %v126
    %129 = vrot.lane.b32.xlu0 %v126, 32
    %v130 = vpop.permute.xlu0 %129
    %132 = vst.msk [vmem:[#allocation2 + $0x9] sm:$0x1] %vm68, %v130
    %s133 = sld [smem:[#allocation3 + $0x4]]
    %s134 = scalar_lea.vmem %s2, %s133
    %v135 = vld [vmem:[%s134] sm:$0x1]
    %136 = vst.msk [vmem:[#allocation2 + $0x8] sm:$0x1] %vm62, %v135
    %138 = vrot.lane.b32.xlu0 %v135, 32
    %v139 = vpop.permute.xlu0 %138
    %141 = vst.msk [vmem:[#allocation2 + $0x6] sm:$0x1] %vm68, %v139
    %s142 = sld [smem:[#allocation3 + $0x84]]
    %s143 = scalar_lea.vmem %s2, %s142
    %v144 = vld [vmem:[%s143] sm:$0x1]
    %145 = vst.msk [vmem:[#allocation2 + $0x9] sm:$0x1] %vm62, %v144
    %147 = vrot.lane.b32.xlu0 %v144, 32
    %v148 = vpop.permute.xlu0 %147
    %150 = vst.msk [vmem:[#allocation2 + $0x7] sm:$0x1] %vm68, %v148
    %s151 = sld [smem:[#allocation3 + $0x5]]
    %s152 = scalar_lea.vmem %s2, %s151
    %v153 = vld [vmem:[%s152] sm:$0x1]
    %154 = vst.msk [vmem:[#allocation2 + $0xa] sm:$0x1] %vm62, %v153
    %156 = vrot.lane.b32.xlu0 %v153, 32
    %v157 = vpop.permute.xlu0 %156
    %159 = vst.msk [vmem:[#allocation2 + $0x4] sm:$0x1] %vm68, %v157
    %s160 = sld [smem:[#allocation3 + $0x85]]
    %s161 = scalar_lea.vmem %s2, %s160
    %v162 = vld [vmem:[%s161] sm:$0x1]
    %163 = vst.msk [vmem:[#allocation2 + $0xb] sm:$0x1] %vm62, %v162
    %165 = vrot.lane.b32.xlu0 %v162, 32
    %v166 = vpop.permute.xlu0 %165
    %168 = vst.msk [vmem:[#allocation2 + $0x5] sm:$0x1] %vm68, %v166
    %s169 = sld [smem:[#allocation3 + $0x6]]
    %s170 = scalar_lea.vmem %s2, %s169
    %v171 = vld [vmem:[%s170] sm:$0x1]
    %172 = vst.msk [vmem:[#allocation2 + $0xc] sm:$0x1] %vm62, %v171
    %174 = vrot.lane.b32.xlu0 %v171, 32
    %v175 = vpop.permute.xlu0 %174
    %177 = vst.msk [vmem:[#allocation2 + $0x2] sm:$0x1] %vm68, %v175
    %s178 = sld [smem:[#allocation3 + $0x86]]
    %s179 = scalar_lea.vmem %s2, %s178
    %v180 = vld [vmem:[%s179] sm:$0x1]
    %181 = vst.msk [vmem:[#allocation2 + $0xd] sm:$0x1] %vm62, %v180
    %183 = vrot.lane.b32.xlu0 %v180, 32
    %v184 = vpop.permute.xlu0 %183
    %186 = vst.msk [vmem:[#allocation2 + $0x3] sm:$0x1] %vm68, %v184
    %s187 = sld [smem:[#allocation3 + $0x7]]
    %s188 = scalar_lea.vmem %s2, %s187
    %v189 = vld [vmem:[%s188] sm:$0x1]
    %190 = vst.msk [vmem:[#allocation2 + $0xe] sm:$0x1] %vm62, %v189
    %192 = vrot.lane.b32.xlu0 %v189, 32
    %v193 = vpop.permute.xlu0 %192
    %195 = vst.msk [vmem:[#allocation2] sm:$0x1] %vm68, %v193
    %s196 = sld [smem:[#allocation3 + $0x87]]
    %s197 = scalar_lea.vmem %s2, %s196
    %v198 = vld [vmem:[%s197] sm:$0x1]
    %199 = vst.msk [vmem:[#allocation2 + $0xf] sm:$0x1] %vm62, %v198
    %201 = vrot.lane.b32.xlu0 %v198, 32
    %v202 = vpop.permute.xlu0 %201
    %204 = vst.msk [vmem:[#allocation2 + $0x1] sm:$0x1] %vm68, %v202
    %v205 = vld [vmem:[#allocation2] sm:$0xff]
    %v206 = vld [vmem:[#allocation2 + $0x8] sm:$0xff]
    %v207 = vld [vmem:[%s3] sm:$0xff]
    %v208 = vld [vmem:[%s3 + $0x8] sm:$0xff]
    %v209 = vld [vmem:[%s3 + $0x10] sm:$0xff]
    %v210 = vld [vmem:[%s3 + $0x18] sm:$0xff]
    %v211 = vld [vmem:[%s3 + $0x20] sm:$0xff]
    %v212 = vld [vmem:[%s3 + $0x28] sm:$0xff]
    %v213 = vld [vmem:[%s3 + $0x30] sm:$0xff]
    %v214 = vld [vmem:[%s3 + $0x38] sm:$0xff]
    %v215 = vld [vmem:[%s3 + $0x40] sm:$0xff]
    %v216 = vld [vmem:[%s3 + $0x48] sm:$0xff]
    %v217 = vld [vmem:[%s3 + $0x50] sm:$0xff]
    %v218 = vld [vmem:[%s3 + $0x58] sm:$0xff]
    %v219 = vld [vmem:[%s3 + $0x60] sm:$0xff]
    %v220 = vld [vmem:[%s3 + $0x68] sm:$0xff]
    %v221 = vld [vmem:[%s3 + $0x70] sm:$0xff]
    %v222 = vld [vmem:[%s3 + $0x78] sm:$0xff]
    %v223 = vld [vmem:[%s4] sm:$0x3]
    %v225 = vperm.slane %v223, 0
    %v226 = vperm.slane %v223, 1
    %vm229 = vcmask 523264
    %v231 = vsel %vm229, %v205, 0
    %v234 = vsel %vm229, %v206, 0
    %236 = vmatpush.msra.mxu0 0.0
    %237 = vmatpush.msra.mxu0 0.0
    %238 = vmatpush.msra.mxu0 0.0
    %239 = vmatpush.msra.mxu0 0.0
    %240 = vmatpush.msra.mxu0 0.0
    %241 = vmatpush.msra.mxu0 0.0
    %242 = vmatpush.msra.mxu0 0.0
    %243 = vmatpush.msra.mxu0 0.0
    %244 = vmatpush.msra.mxu0 %v221
    %245 = vmatpush.msra.mxu0 %v219
    %246 = vmatpush.msra.mxu0 %v217
    %247 = vmatpush.msra.mxu0 %v215
    %248 = vmatpush.msra.mxu0 %v213
    %249 = vmatpush.msra.mxu0 %v211
    %250 = vmatpush.msra.mxu0 %v209
    %251 = vmatpush.msra.mxu0 %v207
    %252 = vmatmul.f32.gmra.mxu0 %v231
    %v253 = vpop.f32.mrf.mxu0
    %v254 = vadd.f32 %v225, %v253
    %255 = vmatmul.f32.gmra.mxu0 %v234
    %v256 = vpop.f32.mrf.mxu0
    %v257 = vadd.f32 %v225, %v256
    %258 = vdwg.mxu0
    %259 = vmatpush.msra.mxu0 0.0
    %260 = vmatpush.msra.mxu0 0.0
    %261 = vmatpush.msra.mxu0 0.0
    %262 = vmatpush.msra.mxu0 0.0
    %263 = vmatpush.msra.mxu0 0.0
    %264 = vmatpush.msra.mxu0 0.0
    %265 = vmatpush.msra.mxu0 0.0
    %266 = vmatpush.msra.mxu0 0.0
    %267 = vmatpush.msra.mxu0 %v222
    %268 = vmatpush.msra.mxu0 %v220
    %269 = vmatpush.msra.mxu0 %v218
    %270 = vmatpush.msra.mxu0 %v216
    %271 = vmatpush.msra.mxu0 %v214
    %272 = vmatpush.msra.mxu0 %v212
    %273 = vmatpush.msra.mxu0 %v210
    %274 = vmatpush.msra.mxu0 %v208
    %275 = vmatmul.f32.gmra.mxu0 %v231
    %v276 = vpop.f32.mrf.mxu0
    %v277 = vadd.f32 %v226, %v276
    %278 = vmatmul.f32.gmra.mxu0 %v234
    %v279 = vpop.f32.mrf.mxu0
    %v280 = vadd.f32 %v226, %v279
    %281 = vdwg.mxu0
    %v282 = vld [vmem:[%s1] sm:$0x3]
    %v283 = vcvt.s32.f32 %v282
    %v284 = vld [vmem:[#allocation7] sm:$0xff]
    %v285 = vld [vmem:[#allocation7 + $0x8] sm:$0xff]
    %v286 = vld [vmem:[#allocation7 + $0x10] sm:$0xff]
    %v287 = vld [vmem:[#allocation7 + $0x18] sm:$0xff]
    %v288 = vld [vmem:[#allocation7 + $0x20] sm:$0xff]
    %v289 = vld [vmem:[#allocation7 + $0x28] sm:$0xff]
    %v290 = vld [vmem:[#allocation7 + $0x30] sm:$0xff]
    %v291 = vld [vmem:[#allocation7 + $0x38] sm:$0xff]
    %v292 = vld [vmem:[#allocation7 + $0x40] sm:$0xff]
    %v293 = vld [vmem:[#allocation7 + $0x48] sm:$0xff]
    %v294 = vld [vmem:[#allocation7 + $0x50] sm:$0xff]
    %v295 = vld [vmem:[#allocation7 + $0x58] sm:$0xff]
    %v296 = vld [vmem:[#allocation7 + $0x60] sm:$0xff]
    %v297 = vld [vmem:[#allocation7 + $0x68] sm:$0xff]
    %v298 = vld [vmem:[#allocation7 + $0x70] sm:$0xff]
    %v299 = vld [vmem:[#allocation7 + $0x78] sm:$0xff]
    %v301 = vsel %vm229, 0.0, 0
    %303 = vmatpush.msra.mxu0 0.0
    %304 = vmatpush.msra.mxu0 0.0
    %305 = vmatpush.msra.mxu0 0.0
    %306 = vmatpush.msra.mxu0 0.0
    %307 = vmatpush.msra.mxu0 0.0
    %308 = vmatpush.msra.mxu0 0.0
    %309 = vmatpush.msra.mxu0 0.0
    %310 = vmatpush.msra.mxu0 0.0
    %311 = vmatpush.msra.mxu0 %v298
    %312 = vmatpush.msra.mxu0 %v296
    %313 = vmatpush.msra.mxu0 %v294
    %314 = vmatpush.msra.mxu0 %v292
    %315 = vmatpush.msra.mxu0 %v290
    %316 = vmatpush.msra.mxu0 %v288
    %317 = vmatpush.msra.mxu0 %v286
    %318 = vmatpush.msra.mxu0 %v284
    %319 = vmatmul.f32.gmra.mxu0 %v301
    %v320 = vpop.f32.mrf.mxu0
    %v321 = vadd.f32 0.0, %v320
    %322 = vdwg.mxu0
    %323 = vmatpush.msra.mxu0 0.0
    %324 = vmatpush.msra.mxu0 0.0
    %325 = vmatpush.msra.mxu0 0.0
    %326 = vmatpush.msra.mxu0 0.0
    %327 = vmatpush.msra.mxu0 0.0
    %328 = vmatpush.msra.mxu0 0.0
    %329 = vmatpush.msra.mxu0 0.0
    %330 = vmatpush.msra.mxu0 0.0
    %331 = vmatpush.msra.mxu0 %v299
    %332 = vmatpush.msra.mxu0 %v297
    %333 = vmatpush.msra.mxu0 %v295
    %334 = vmatpush.msra.mxu0 %v293
    %335 = vmatpush.msra.mxu0 %v291
    %336 = vmatpush.msra.mxu0 %v289
    %337 = vmatpush.msra.mxu0 %v287
    %338 = vmatpush.msra.mxu0 %v285
    %339 = vmatmul.f32.gmra.mxu0 %v301
    %v340 = vpop.f32.mrf.mxu0
    %v341 = vadd.f32 0.0, %v340
    %342 = vdwg.mxu0
    %v343 = vadd.f32 %v254, %v321
    %v344 = vadd.f32 %v277, %v341
    %v345 = vxor.u32 %v343, 2147483648
    %v346 = vxor.u32 %v344, 2147483648
    %v347 = vmul.f32 %v345, 1.442695
    %v348 = vpow.pop %v347
    %v349 = vmul.f32 %v346, 1.442695
    %v350 = vpow.pop %v349
    %v351 = vadd.f32 %v348, 1.0
    %v352 = vadd.f32 %v350, 1.0
    %v353 = vrcp.pop %v351
    %v354 = vmul.f32 %v351, %v353
    %v355 = vsub.f32 1.0, %v354
    %v356 = vmul.f32 %v353, %v355
    %v357 = vadd.f32 %v353, %v356
    %vm358 = vweird.f32 %v351
    %vm359 = vweird.f32 %v353
    %vm360 = vmor %vm358, %vm359
    %v361 = vsel %vm360, %v353, %v357
    %v362 = vand.u32 2147483647, %v351
    %vm363 = vcmp.eq.f32.partialorder %v362, 8.507059e+37
    %v364 = vand.u32 %v351, 2147483648
    %v365 = vor.u32 1.1754944e-38, %v364
    %v366 = vsel %vm363, %v365, %v361
    %v367 = vmul.f32 1.0, %v366
    %v368 = vrcp.pop %v352
    %v369 = vmul.f32 %v352, %v368
    %v370 = vsub.f32 1.0, %v369
    %v371 = vmul.f32 %v368, %v370
    %v372 = vadd.f32 %v368, %v371
    %vm373 = vweird.f32 %v352
    %vm374 = vweird.f32 %v368
    %vm375 = vmor %vm373, %vm374
    %v376 = vsel %vm375, %v368, %v372
    %v377 = vand.u32 2147483647, %v352
    %vm378 = vcmp.eq.f32.partialorder %v377, 8.507059e+37
    %v379 = vand.u32 %v352, 2147483648
    %v380 = vor.u32 1.1754944e-38, %v379
    %v381 = vsel %vm378, %v380, %v376
    %v382 = vmul.f32 1.0, %v381
    %v383 = vtanh.pop %v344
    %v384 = vmul.f32 %v367, 0.0
    %386 = vrot.lane.b32.xlu0 %v383, 64
    %v387 = vpop.permute.xlu0 %386
    %v389 = vmul.f32 %v367, %v387
    %391 = vrot.lane.b32.xlu0 %v389, 64
    %v392 = vpop.permute.xlu0 %391
    %v394 = vadd.f32 %v384, %v392
    %v395 = vtanh.pop %v394
    %397 = vrot.lane.b32.xlu0 %v395, 64
    %v398 = vpop.permute.xlu0 %397
    %v400 = vmul.f32 %v382, %v398
    %402 = vset.pattern.permute.xlu0 0
    %403 = vperm.xlu0 %402, %v283
    %v404 = vpop.permute.xlu0 %403
    %406 = vset.pattern.permute.xlu0 7
    %407 = vperm.xlu0 %406, %v283
    %v408 = vpop.permute.xlu0 %407
    %vm410 = vcmask 261120
    %v411 = vsel %vm410, %v404, %v408
    %v412 = vmul.f32 %v411, %v400
    %v413 = vadd.f32 %v412, 0.0
    %415 = vrot.lane.b32.xlu0 %v394, 64
    %v416 = vpop.permute.xlu0 %415
    %v418 = vmul.f32 %v411, %v416
    %v419 = vadd.f32 %v418, 0.0
    %v421 = vsel %vm229, %v413, 0
    %423 = vmatpush.msra.mxu0 0.0
    %424 = vmatpush.msra.mxu0 0.0
    %425 = vmatpush.msra.mxu0 0.0
    %426 = vmatpush.msra.mxu0 0.0
    %427 = vmatpush.msra.mxu0 0.0
    %428 = vmatpush.msra.mxu0 0.0
    %429 = vmatpush.msra.mxu0 0.0
    %430 = vmatpush.msra.mxu0 0.0
    %431 = vmatpush.msra.mxu0 %v298
    %432 = vmatpush.msra.mxu0 %v296
    %433 = vmatpush.msra.mxu0 %v294
    %434 = vmatpush.msra.mxu0 %v292
    %435 = vmatpush.msra.mxu0 %v290
    %436 = vmatpush.msra.mxu0 %v288
    %437 = vmatpush.msra.mxu0 %v286
    %438 = vmatpush.msra.mxu0 %v284
    %439 = vmatmul.f32.gmra.mxu0 %v421
    %v440 = vpop.f32.mrf.mxu0
    %v441 = vadd.f32 0.0, %v440
    %442 = vdwg.mxu0
    %443 = vmatpush.msra.mxu0 0.0
    %444 = vmatpush.msra.mxu0 0.0
    %445 = vmatpush.msra.mxu0 0.0
    %446 = vmatpush.msra.mxu0 0.0
    %447 = vmatpush.msra.mxu0 0.0
    %448 = vmatpush.msra.mxu0 0.0
    %449 = vmatpush.msra.mxu0 0.0
    %450 = vmatpush.msra.mxu0 0.0
    %451 = vmatpush.msra.mxu0 %v299
    %452 = vmatpush.msra.mxu0 %v297
    %453 = vmatpush.msra.mxu0 %v295
    %454 = vmatpush.msra.mxu0 %v293
    %455 = vmatpush.msra.mxu0 %v291
    %456 = vmatpush.msra.mxu0 %v289
    %457 = vmatpush.msra.mxu0 %v287
    %458 = vmatpush.msra.mxu0 %v285
    %459 = vmatmul.f32.gmra.mxu0 %v421
    %v460 = vpop.f32.mrf.mxu0
    %v461 = vadd.f32 0.0, %v460
    %462 = vdwg.mxu0
    %v465 = vrot.slane %v441, 6
    %v466 = vrot.slane %v461, 6
    %v469 = vadd.f32 %v254, %v465
    %v470 = vadd.f32 %v277, %v466
    %v471 = vxor.u32 %v469, 2147483648
    %v472 = vxor.u32 %v470, 2147483648
    %v473 = vmul.f32 %v471, 1.442695
    %v474 = vpow.pop %v473
    %v475 = vmul.f32 %v472, 1.442695
    %v476 = vpow.pop %v475
    %v477 = vadd.f32 %v474, 1.0
    %v478 = vadd.f32 %v476, 1.0
    %v479 = vrcp.pop %v477
    %v480 = vmul.f32 %v477, %v479
    %v481 = vsub.f32 1.0, %v480
    %v482 = vmul.f32 %v479, %v481
    %v483 = vadd.f32 %v479, %v482
    %vm484 = vweird.f32 %v477
    %vm485 = vweird.f32 %v479
    %vm486 = vmor %vm484, %vm485
    %v487 = vsel %vm486, %v479, %v483
    %v488 = vand.u32 2147483647, %v477
    %vm489 = vcmp.eq.f32.partialorder %v488, 8.507059e+37
    %v490 = vand.u32 %v477, 2147483648
    %v491 = vor.u32 1.1754944e-38, %v490
    %v492 = vsel %vm489, %v491, %v487
    %v493 = vmul.f32 1.0, %v492
    %v494 = vrcp.pop %v478
    %v495 = vmul.f32 %v478, %v494
    %v496 = vsub.f32 1.0, %v495
    %v497 = vmul.f32 %v494, %v496
    %v498 = vadd.f32 %v494, %v497
    %vm499 = vweird.f32 %v478
    %vm500 = vweird.f32 %v494
    %vm501 = vmor %vm499, %vm500
    %v502 = vsel %vm501, %v494, %v498
    %v503 = vand.u32 2147483647, %v478
    %vm504 = vcmp.eq.f32.partialorder %v503, 8.507059e+37
    %v505 = vand.u32 %v478, 2147483648
    %v506 = vor.u32 1.1754944e-38, %v505
    %v507 = vsel %vm504, %v506, %v502
    %v508 = vmul.f32 1.0, %v507
    %v509 = vtanh.pop %v470
    %v511 = vrot.slane %v419, 6
    %512 = vrot.lane.b32.xlu0 %v511, 64
    %v513 = vpop.permute.xlu0 %512
    %v515 = vmul.f32 %v493, %v513
    %517 = vrot.lane.b32.xlu0 %v509, 64
    %v518 = vpop.permute.xlu0 %517
    %v520 = vmul.f32 %v493, %v518
    %522 = vrot.lane.b32.xlu0 %v520, 64
    %v523 = vpop.permute.xlu0 %522
    %v525 = vadd.f32 %v515, %v523
    %v526 = vtanh.pop %v525
    %528 = vrot.lane.b32.xlu0 %v526, 64
    %v529 = vpop.permute.xlu0 %528
    %v531 = vmul.f32 %v508, %v529
    %532 = vset.pattern.permute.xlu0 1
    %533 = vperm.xlu0 %532, %v283
    %v534 = vpop.permute.xlu0 %533
    %536 = vset.pattern.permute.xlu0 6
    %537 = vperm.xlu0 %536, %v283
    %v538 = vpop.permute.xlu0 %537
    %v540 = vsel %vm410, %v534, %v538
    %v542 = vrot.slane %v531, 2
    %v544 = vmul.f32 %v540, %v542
    %v545 = vadd.f32 %v413, %v544
    %v546 = vrot.slane %v413, 6
    %v548 = vsub.f32 %v531, %v546
    %v550 = vrot.slane %v548, 2
    %v552 = vmul.f32 %v540, %v550
    %v553 = vadd.f32 %v413, %v552
    %v554 = vsub.f32 %v525, %v513
    %v556 = vrot.slane %v554, 2
    %557 = vrot.lane.b32.xlu0 %v556, 64
    %v558 = vpop.permute.xlu0 %557
    %v560 = vmul.f32 %v540, %v558
    %v561 = vadd.f32 %v419, %v560
    %v563 = vsel %vm229, %v553, 0
    %565 = vmatpush.msra.mxu0 0.0
    %566 = vmatpush.msra.mxu0 0.0
    %567 = vmatpush.msra.mxu0 0.0
    %568 = vmatpush.msra.mxu0 0.0
    %569 = vmatpush.msra.mxu0 0.0
    %570 = vmatpush.msra.mxu0 0.0
    %571 = vmatpush.msra.mxu0 0.0
    %572 = vmatpush.msra.mxu0 0.0
    %573 = vmatpush.msra.mxu0 %v298
    %574 = vmatpush.msra.mxu0 %v296
    %575 = vmatpush.msra.mxu0 %v294
    %576 = vmatpush.msra.mxu0 %v292
    %577 = vmatpush.msra.mxu0 %v290
    %578 = vmatpush.msra.mxu0 %v288
    %579 = vmatpush.msra.mxu0 %v286
    %580 = vmatpush.msra.mxu0 %v284
    %581 = vmatmul.f32.gmra.mxu0 %v563
    %v582 = vpop.f32.mrf.mxu0
    %v583 = vadd.f32 0.0, %v582
    %584 = vdwg.mxu0
    %585 = vmatpush.msra.mxu0 0.0
    %586 = vmatpush.msra.mxu0 0.0
    %587 = vmatpush.msra.mxu0 0.0
    %588 = vmatpush.msra.mxu0 0.0
    %589 = vmatpush.msra.mxu0 0.0
    %590 = vmatpush.msra.mxu0 0.0
    %591 = vmatpush.msra.mxu0 0.0
    %592 = vmatpush.msra.mxu0 0.0
    %593 = vmatpush.msra.mxu0 %v299
    %594 = vmatpush.msra.mxu0 %v297
    %595 = vmatpush.msra.mxu0 %v295
    %596 = vmatpush.msra.mxu0 %v293
    %597 = vmatpush.msra.mxu0 %v291
    %598 = vmatpush.msra.mxu0 %v289
    %599 = vmatpush.msra.mxu0 %v287
    %600 = vmatpush.msra.mxu0 %v285
    %601 = vmatmul.f32.gmra.mxu0 %v563
    %v602 = vpop.f32.mrf.mxu0
    %v603 = vadd.f32 0.0, %v602
    %604 = vdwg.mxu0
    %v607 = vrot.slane %v583, 4
    %v608 = vrot.slane %v603, 4
    %v611 = vadd.f32 %v254, %v607
    %v612 = vadd.f32 %v277, %v608
    %v613 = vxor.u32 %v611, 2147483648
    %v614 = vxor.u32 %v612, 2147483648
    %v615 = vmul.f32 %v613, 1.442695
    %v616 = vpow.pop %v615
    %v617 = vmul.f32 %v614, 1.442695
    %v618 = vpow.pop %v617
    %v619 = vadd.f32 %v616, 1.0
    %v620 = vadd.f32 %v618, 1.0
    %v621 = vrcp.pop %v619
    %v622 = vmul.f32 %v619, %v621
    %v623 = vsub.f32 1.0, %v622
    %v624 = vmul.f32 %v621, %v623
    %v625 = vadd.f32 %v621, %v624
    %vm626 = vweird.f32 %v619
    %vm627 = vweird.f32 %v621
    %vm628 = vmor %vm626, %vm627
    %v629 = vsel %vm628, %v621, %v625
    %v630 = vand.u32 2147483647, %v619
    %vm631 = vcmp.eq.f32.partialorder %v630, 8.507059e+37
    %v632 = vand.u32 %v619, 2147483648
    %v633 = vor.u32 1.1754944e-38, %v632
    %v634 = vsel %vm631, %v633, %v629
    %v635 = vmul.f32 1.0, %v634
    %v636 = vrcp.pop %v620
    %v637 = vmul.f32 %v620, %v636
    %v638 = vsub.f32 1.0, %v637
    %v639 = vmul.f32 %v636, %v638
    %v640 = vadd.f32 %v636, %v639
    %vm641 = vweird.f32 %v620
    %vm642 = vweird.f32 %v636
    %vm643 = vmor %vm641, %vm642
    %v644 = vsel %vm643, %v636, %v640
    %v645 = vand.u32 2147483647, %v620
    %vm646 = vcmp.eq.f32.partialorder %v645, 8.507059e+37
    %v647 = vand.u32 %v620, 2147483648
    %v648 = vor.u32 1.1754944e-38, %v647
    %v649 = vsel %vm646, %v648, %v644
    %v650 = vmul.f32 1.0, %v649
    %v651 = vtanh.pop %v612
    %v653 = vrot.slane %v561, 4
    %654 = vrot.lane.b32.xlu0 %v653, 64
    %v655 = vpop.permute.xlu0 %654
    %v657 = vmul.f32 %v635, %v655
    %659 = vrot.lane.b32.xlu0 %v651, 64
    %v660 = vpop.permute.xlu0 %659
    %v662 = vmul.f32 %v635, %v660
    %664 = vrot.lane.b32.xlu0 %v662, 64
    %v665 = vpop.permute.xlu0 %664
    %v667 = vadd.f32 %v657, %v665
    %v668 = vtanh.pop %v667
    %670 = vrot.lane.b32.xlu0 %v668, 64
    %v671 = vpop.permute.xlu0 %670
    %v673 = vmul.f32 %v650, %v671
    %674 = vset.pattern.permute.xlu0 2
    %675 = vperm.xlu0 %674, %v283
    %v676 = vpop.permute.xlu0 %675
    %678 = vset.pattern.permute.xlu0 5
    %679 = vperm.xlu0 %678, %v283
    %v680 = vpop.permute.xlu0 %679
    %v682 = vsel %vm410, %v676, %v680
    %v684 = vrot.slane %v673, 4
    %v686 = vmul.f32 %v682, %v684
    %v687 = vadd.f32 %v545, %v686
    %v688 = vrot.slane %v553, 4
    %v690 = vsub.f32 %v673, %v688
    %v692 = vrot.slane %v690, 4
    %v694 = vmul.f32 %v682, %v692
    %v695 = vadd.f32 %v553, %v694
    %v696 = vsub.f32 %v667, %v655
    %v698 = vrot.slane %v696, 4
    %699 = vrot.lane.b32.xlu0 %v698, 64
    %v700 = vpop.permute.xlu0 %699
    %v702 = vmul.f32 %v682, %v700
    %v703 = vadd.f32 %v561, %v702
    %v705 = vsel %vm229, %v695, 0
    %707 = vmatpush.msra.mxu0 0.0
    %708 = vmatpush.msra.mxu0 0.0
    %709 = vmatpush.msra.mxu0 0.0
    %710 = vmatpush.msra.mxu0 0.0
    %711 = vmatpush.msra.mxu0 0.0
    %712 = vmatpush.msra.mxu0 0.0
    %713 = vmatpush.msra.mxu0 0.0
    %714 = vmatpush.msra.mxu0 0.0
    %715 = vmatpush.msra.mxu0 %v298
    %716 = vmatpush.msra.mxu0 %v296
    %717 = vmatpush.msra.mxu0 %v294
    %718 = vmatpush.msra.mxu0 %v292
    %719 = vmatpush.msra.mxu0 %v290
    %720 = vmatpush.msra.mxu0 %v288
    %721 = vmatpush.msra.mxu0 %v286
    %722 = vmatpush.msra.mxu0 %v284
    %723 = vmatmul.f32.gmra.mxu0 %v705
    %v724 = vpop.f32.mrf.mxu0
    %v725 = vadd.f32 0.0, %v724
    %726 = vdwg.mxu0
    %727 = vmatpush.msra.mxu0 0.0
    %728 = vmatpush.msra.mxu0 0.0
    %729 = vmatpush.msra.mxu0 0.0
    %730 = vmatpush.msra.mxu0 0.0
    %731 = vmatpush.msra.mxu0 0.0
    %732 = vmatpush.msra.mxu0 0.0
    %733 = vmatpush.msra.mxu0 0.0
    %734 = vmatpush.msra.mxu0 0.0
    %735 = vmatpush.msra.mxu0 %v299
    %736 = vmatpush.msra.mxu0 %v297
    %737 = vmatpush.msra.mxu0 %v295
    %738 = vmatpush.msra.mxu0 %v293
    %739 = vmatpush.msra.mxu0 %v291
    %740 = vmatpush.msra.mxu0 %v289
    %741 = vmatpush.msra.mxu0 %v287
    %742 = vmatpush.msra.mxu0 %v285
    %743 = vmatmul.f32.gmra.mxu0 %v705
    %v744 = vpop.f32.mrf.mxu0
    %v745 = vadd.f32 0.0, %v744
    %746 = vdwg.mxu0
    %v749 = vrot.slane %v725, 2
    %v750 = vrot.slane %v745, 2
    %v753 = vadd.f32 %v254, %v749
    %v754 = vadd.f32 %v277, %v750
    %v755 = vxor.u32 %v753, 2147483648
    %v756 = vxor.u32 %v754, 2147483648
    %v757 = vmul.f32 %v755, 1.442695
    %v758 = vpow.pop %v757
    %v759 = vmul.f32 %v756, 1.442695
    %v760 = vpow.pop %v759
    %v761 = vadd.f32 %v758, 1.0
    %v762 = vadd.f32 %v760, 1.0
    %v763 = vrcp.pop %v761
    %v764 = vmul.f32 %v761, %v763
    %v765 = vsub.f32 1.0, %v764
    %v766 = vmul.f32 %v763, %v765
    %v767 = vadd.f32 %v763, %v766
    %vm768 = vweird.f32 %v761
    %vm769 = vweird.f32 %v763
    %vm770 = vmor %vm768, %vm769
    %v771 = vsel %vm770, %v763, %v767
    %v772 = vand.u32 2147483647, %v761
    %vm773 = vcmp.eq.f32.partialorder %v772, 8.507059e+37
    %v774 = vand.u32 %v761, 2147483648
    %v775 = vor.u32 1.1754944e-38, %v774
    %v776 = vsel %vm773, %v775, %v771
    %v777 = vmul.f32 1.0, %v776
    %v778 = vrcp.pop %v762
    %v779 = vmul.f32 %v762, %v778
    %v780 = vsub.f32 1.0, %v779
    %v781 = vmul.f32 %v778, %v780
    %v782 = vadd.f32 %v778, %v781
    %vm783 = vweird.f32 %v762
    %vm784 = vweird.f32 %v778
    %vm785 = vmor %vm783, %vm784
    %v786 = vsel %vm785, %v778, %v782
    %v787 = vand.u32 2147483647, %v762
    %vm788 = vcmp.eq.f32.partialorder %v787, 8.507059e+37
    %v789 = vand.u32 %v762, 2147483648
    %v790 = vor.u32 1.1754944e-38, %v789
    %v791 = vsel %vm788, %v790, %v786
    %v792 = vmul.f32 1.0, %v791
    %v793 = vtanh.pop %v754
    %v795 = vrot.slane %v703, 2
    %796 = vrot.lane.b32.xlu0 %v795, 64
    %v797 = vpop.permute.xlu0 %796
    %v799 = vmul.f32 %v777, %v797
    %801 = vrot.lane.b32.xlu0 %v793, 64
    %v802 = vpop.permute.xlu0 %801
    %v804 = vmul.f32 %v777, %v802
    %806 = vrot.lane.b32.xlu0 %v804, 64
    %v807 = vpop.permute.xlu0 %806
    %v809 = vadd.f32 %v799, %v807
    %v810 = vtanh.pop %v809
    %812 = vrot.lane.b32.xlu0 %v810, 64
    %v813 = vpop.permute.xlu0 %812
    %v815 = vmul.f32 %v792, %v813
    %816 = vset.pattern.permute.xlu0 3
    %817 = vperm.xlu0 %816, %v283
    %v818 = vpop.permute.xlu0 %817
    %820 = vset.pattern.permute.xlu0 4
    %821 = vperm.xlu0 %820, %v283
    %v822 = vpop.permute.xlu0 %821
    %v824 = vsel %vm410, %v818, %v822
    %v826 = vrot.slane %v815, 6
    %v828 = vmul.f32 %v824, %v826
    %v829 = vadd.f32 %v687, %v828
    %v830 = vrot.slane %v695, 2
    %v832 = vsub.f32 %v815, %v830
    %v834 = vrot.slane %v832, 6
    %v836 = vmul.f32 %v824, %v834
    %v837 = vadd.f32 %v695, %v836
    %v838 = vsub.f32 %v809, %v797
    %v840 = vrot.slane %v838, 6
    %841 = vrot.lane.b32.xlu0 %v840, 64
    %v842 = vpop.permute.xlu0 %841
    %v844 = vmul.f32 %v824, %v842
    %v845 = vadd.f32 %v703, %v844
    %v847 = vsel %vm229, %v837, 0
    %849 = vmatpush.msra.mxu0 0.0
    %850 = vmatpush.msra.mxu0 0.0
    %851 = vmatpush.msra.mxu0 0.0
    %852 = vmatpush.msra.mxu0 0.0
    %853 = vmatpush.msra.mxu0 0.0
    %854 = vmatpush.msra.mxu0 0.0
    %855 = vmatpush.msra.mxu0 0.0
    %856 = vmatpush.msra.mxu0 0.0
    %857 = vmatpush.msra.mxu0 %v298
    %858 = vmatpush.msra.mxu0 %v296
    %859 = vmatpush.msra.mxu0 %v294
    %860 = vmatpush.msra.mxu0 %v292
    %861 = vmatpush.msra.mxu0 %v290
    %862 = vmatpush.msra.mxu0 %v288
    %863 = vmatpush.msra.mxu0 %v286
    %864 = vmatpush.msra.mxu0 %v284
    %865 = vmatmul.f32.gmra.mxu0 %v847
    %v866 = vpop.f32.mrf.mxu0
    %v867 = vadd.f32 0.0, %v866
    %868 = vdwg.mxu0
    %869 = vmatpush.msra.mxu0 0.0
    %870 = vmatpush.msra.mxu0 0.0
    %871 = vmatpush.msra.mxu0 0.0
    %872 = vmatpush.msra.mxu0 0.0
    %873 = vmatpush.msra.mxu0 0.0
    %874 = vmatpush.msra.mxu0 0.0
    %875 = vmatpush.msra.mxu0 0.0
    %876 = vmatpush.msra.mxu0 0.0
    %877 = vmatpush.msra.mxu0 %v299
    %878 = vmatpush.msra.mxu0 %v297
    %879 = vmatpush.msra.mxu0 %v295
    %880 = vmatpush.msra.mxu0 %v293
    %881 = vmatpush.msra.mxu0 %v291
    %882 = vmatpush.msra.mxu0 %v289
    %883 = vmatpush.msra.mxu0 %v287
    %884 = vmatpush.msra.mxu0 %v285
    %885 = vmatmul.f32.gmra.mxu0 %v847
    %v886 = vpop.f32.mrf.mxu0
    %v887 = vadd.f32 0.0, %v886
    %888 = vdwg.mxu0
    %v889 = vadd.f32 %v257, %v867
    %v890 = vadd.f32 %v280, %v887
    %v891 = vxor.u32 %v889, 2147483648
    %v892 = vxor.u32 %v890, 2147483648
    %v893 = vmul.f32 %v891, 1.442695
    %v894 = vpow.pop %v893
    %v895 = vmul.f32 %v892, 1.442695
    %v896 = vpow.pop %v895
    %v897 = vadd.f32 %v894, 1.0
    %v898 = vadd.f32 %v896, 1.0
    %v899 = vrcp.pop %v897
    %v900 = vmul.f32 %v897, %v899
    %v901 = vsub.f32 1.0, %v900
    %v902 = vmul.f32 %v899, %v901
    %v903 = vadd.f32 %v899, %v902
    %vm904 = vweird.f32 %v897
    %vm905 = vweird.f32 %v899
    %vm906 = vmor %vm904, %vm905
    %v907 = vsel %vm906, %v899, %v903
    %v908 = vand.u32 2147483647, %v897
    %vm909 = vcmp.eq.f32.partialorder %v908, 8.507059e+37
    %v910 = vand.u32 %v897, 2147483648
    %v911 = vor.u32 1.1754944e-38, %v910
    %v912 = vsel %vm909, %v911, %v907
    %v913 = vmul.f32 1.0, %v912
    %v914 = vrcp.pop %v898
    %v915 = vmul.f32 %v898, %v914
    %v916 = vsub.f32 1.0, %v915
    %v917 = vmul.f32 %v914, %v916
    %v918 = vadd.f32 %v914, %v917
    %vm919 = vweird.f32 %v898
    %vm920 = vweird.f32 %v914
    %vm921 = vmor %vm919, %vm920
    %v922 = vsel %vm921, %v914, %v918
    %v923 = vand.u32 2147483647, %v898
    %vm924 = vcmp.eq.f32.partialorder %v923, 8.507059e+37
    %v925 = vand.u32 %v898, 2147483648
    %v926 = vor.u32 1.1754944e-38, %v925
    %v927 = vsel %vm924, %v926, %v922
    %v928 = vmul.f32 1.0, %v927
    %v929 = vtanh.pop %v890
    %931 = vrot.lane.b32.xlu0 %v845, 64
    %v932 = vpop.permute.xlu0 %931
    %v934 = vmul.f32 %v913, %v932
    %936 = vrot.lane.b32.xlu0 %v929, 64
    %v937 = vpop.permute.xlu0 %936
    %v939 = vmul.f32 %v913, %v937
    %941 = vrot.lane.b32.xlu0 %v939, 64
    %v942 = vpop.permute.xlu0 %941
    %v944 = vadd.f32 %v934, %v942
    %v945 = vtanh.pop %v944
    %947 = vrot.lane.b32.xlu0 %v945, 64
    %v948 = vpop.permute.xlu0 %947
    %v950 = vmul.f32 %v928, %v948
    %v951 = vsel %vm410, %v822, %v818
    %v952 = vmul.f32 %v951, %v950
    %v953 = vadd.f32 %v829, %v952
    %v954 = vsub.f32 %v950, %v837
    %v955 = vmul.f32 %v951, %v954
    %v956 = vadd.f32 %v837, %v955
    %v957 = vsub.f32 %v944, %v932
    %959 = vrot.lane.b32.xlu0 %v957, 64
    %v960 = vpop.permute.xlu0 %959
    %v962 = vmul.f32 %v951, %v960
    %v963 = vadd.f32 %v845, %v962
    %v965 = vsel %vm229, %v956, 0
    %967 = vmatpush.msra.mxu0 0.0
    %968 = vmatpush.msra.mxu0 0.0
    %969 = vmatpush.msra.mxu0 0.0
    %970 = vmatpush.msra.mxu0 0.0
    %971 = vmatpush.msra.mxu0 0.0
    %972 = vmatpush.msra.mxu0 0.0
    %973 = vmatpush.msra.mxu0 0.0
    %974 = vmatpush.msra.mxu0 0.0
    %975 = vmatpush.msra.mxu0 %v298
    %976 = vmatpush.msra.mxu0 %v296
    %977 = vmatpush.msra.mxu0 %v294
    %978 = vmatpush.msra.mxu0 %v292
    %979 = vmatpush.msra.mxu0 %v290
    %980 = vmatpush.msra.mxu0 %v288
    %981 = vmatpush.msra.mxu0 %v286
    %982 = vmatpush.msra.mxu0 %v284
    %983 = vmatmul.f32.gmra.mxu0 %v965
    %v984 = vpop.f32.mrf.mxu0
    %v985 = vadd.f32 0.0, %v984
    %986 = vdwg.mxu0
    %987 = vmatpush.msra.mxu0 0.0
    %988 = vmatpush.msra.mxu0 0.0
    %989 = vmatpush.msra.mxu0 0.0
    %990 = vmatpush.msra.mxu0 0.0
    %991 = vmatpush.msra.mxu0 0.0
    %992 = vmatpush.msra.mxu0 0.0
    %993 = vmatpush.msra.mxu0 0.0
    %994 = vmatpush.msra.mxu0 0.0
    %995 = vmatpush.msra.mxu0 %v299
    %996 = vmatpush.msra.mxu0 %v297
    %997 = vmatpush.msra.mxu0 %v295
    %998 = vmatpush.msra.mxu0 %v293
    %999 = vmatpush.msra.mxu0 %v291
    %1000 = vmatpush.msra.mxu0 %v289
    %1001 = vmatpush.msra.mxu0 %v287
    %1002 = vmatpush.msra.mxu0 %v285
    %1003 = vmatmul.f32.gmra.mxu0 %v965
    %v1004 = vpop.f32.mrf.mxu0
    %v1005 = vadd.f32 0.0, %v1004
    %1006 = vdwg.mxu0
    %v1009 = vrot.slane %v985, 6
    %v1010 = vrot.slane %v1005, 6
    %v1013 = vadd.f32 %v257, %v1009
    %v1014 = vadd.f32 %v280, %v1010
    %v1015 = vxor.u32 %v1013, 2147483648
    %v1016 = vxor.u32 %v1014, 2147483648
    %v1017 = vmul.f32 %v1015, 1.442695
    %v1018 = vpow.pop %v1017
    %v1019 = vmul.f32 %v1016, 1.442695
    %v1020 = vpow.pop %v1019
    %v1021 = vadd.f32 %v1018, 1.0
    %v1022 = vadd.f32 %v1020, 1.0
    %v1023 = vrcp.pop %v1021
    %v1024 = vmul.f32 %v1021, %v1023
    %v1025 = vsub.f32 1.0, %v1024
    %v1026 = vmul.f32 %v1023, %v1025
    %v1027 = vadd.f32 %v1023, %v1026
    %vm1028 = vweird.f32 %v1021
    %vm1029 = vweird.f32 %v1023
    %vm1030 = vmor %vm1028, %vm1029
    %v1031 = vsel %vm1030, %v1023, %v1027
    %v1032 = vand.u32 2147483647, %v1021
    %vm1033 = vcmp.eq.f32.partialorder %v1032, 8.507059e+37
    %v1034 = vand.u32 %v1021, 2147483648
    %v1035 = vor.u32 1.1754944e-38, %v1034
    %v1036 = vsel %vm1033, %v1035, %v1031
    %v1037 = vmul.f32 1.0, %v1036
    %v1038 = vrcp.pop %v1022
    %v1039 = vmul.f32 %v1022, %v1038
    %v1040 = vsub.f32 1.0, %v1039
    %v1041 = vmul.f32 %v1038, %v1040
    %v1042 = vadd.f32 %v1038, %v1041
    %vm1043 = vweird.f32 %v1022
    %vm1044 = vweird.f32 %v1038
    %vm1045 = vmor %vm1043, %vm1044
    %v1046 = vsel %vm1045, %v1038, %v1042
    %v1047 = vand.u32 2147483647, %v1022
    %vm1048 = vcmp.eq.f32.partialorder %v1047, 8.507059e+37
    %v1049 = vand.u32 %v1022, 2147483648
    %v1050 = vor.u32 1.1754944e-38, %v1049
    %v1051 = vsel %vm1048, %v1050, %v1046
    %v1052 = vmul.f32 1.0, %v1051
    %v1053 = vtanh.pop %v1014
    %v1055 = vrot.slane %v963, 6
    %1056 = vrot.lane.b32.xlu0 %v1055, 64
    %v1057 = vpop.permute.xlu0 %1056
    %v1059 = vmul.f32 %v1037, %v1057
    %1061 = vrot.lane.b32.xlu0 %v1053, 64
    %v1062 = vpop.permute.xlu0 %1061
    %v1064 = vmul.f32 %v1037, %v1062
    %1066 = vrot.lane.b32.xlu0 %v1064, 64
    %v1067 = vpop.permute.xlu0 %1066
    %v1069 = vadd.f32 %v1059, %v1067
    %v1070 = vtanh.pop %v1069
    %1072 = vrot.lane.b32.xlu0 %v1070, 64
    %v1073 = vpop.permute.xlu0 %1072
    %v1075 = vmul.f32 %v1052, %v1073
    %v1076 = vsel %vm410, %v680, %v676
    %v1078 = vrot.slane %v1075, 2
    %v1080 = vmul.f32 %v1076, %v1078
    %v1081 = vadd.f32 %v953, %v1080
    %v1082 = vrot.slane %v956, 6
    %v1084 = vsub.f32 %v1075, %v1082
    %v1086 = vrot.slane %v1084, 2
    %v1088 = vmul.f32 %v1076, %v1086
    %v1089 = vadd.f32 %v956, %v1088
    %v1090 = vsub.f32 %v1069, %v1057
    %v1092 = vrot.slane %v1090, 2
    %1093 = vrot.lane.b32.xlu0 %v1092, 64
    %v1094 = vpop.permute.xlu0 %1093
    %v1096 = vmul.f32 %v1076, %v1094
    %v1097 = vadd.f32 %v963, %v1096
    %v1099 = vsel %vm229, %v1089, 0
    %1101 = vmatpush.msra.mxu0 0.0
    %1102 = vmatpush.msra.mxu0 0.0
    %1103 = vmatpush.msra.mxu0 0.0
    %1104 = vmatpush.msra.mxu0 0.0
    %1105 = vmatpush.msra.mxu0 0.0
    %1106 = vmatpush.msra.mxu0 0.0
    %1107 = vmatpush.msra.mxu0 0.0
    %1108 = vmatpush.msra.mxu0 0.0
    %1109 = vmatpush.msra.mxu0 %v298
    %1110 = vmatpush.msra.mxu0 %v296
    %1111 = vmatpush.msra.mxu0 %v294
    %1112 = vmatpush.msra.mxu0 %v292
    %1113 = vmatpush.msra.mxu0 %v290
    %1114 = vmatpush.msra.mxu0 %v288
    %1115 = vmatpush.msra.mxu0 %v286
    %1116 = vmatpush.msra.mxu0 %v284
    %1117 = vmatmul.f32.gmra.mxu0 %v1099
    %v1118 = vpop.f32.mrf.mxu0
    %v1119 = vadd.f32 0.0, %v1118
    %1120 = vdwg.mxu0
    %1121 = vmatpush.msra.mxu0 0.0
    %1122 = vmatpush.msra.mxu0 0.0
    %1123 = vmatpush.msra.mxu0 0.0
    %1124 = vmatpush.msra.mxu0 0.0
    %1125 = vmatpush.msra.mxu0 0.0
    %1126 = vmatpush.msra.mxu0 0.0
    %1127 = vmatpush.msra.mxu0 0.0
    %1128 = vmatpush.msra.mxu0 0.0
    %1129 = vmatpush.msra.mxu0 %v299
    %1130 = vmatpush.msra.mxu0 %v297
    %1131 = vmatpush.msra.mxu0 %v295
    %1132 = vmatpush.msra.mxu0 %v293
    %1133 = vmatpush.msra.mxu0 %v291
    %1134 = vmatpush.msra.mxu0 %v289
    %1135 = vmatpush.msra.mxu0 %v287
    %1136 = vmatpush.msra.mxu0 %v285
    %1137 = vmatmul.f32.gmra.mxu0 %v1099
    %v1138 = vpop.f32.mrf.mxu0
    %v1139 = vadd.f32 0.0, %v1138
    %1140 = vdwg.mxu0
    %v1143 = vrot.slane %v1119, 4
    %v1144 = vrot.slane %v1139, 4
    %v1147 = vadd.f32 %v257, %v1143
    %v1148 = vadd.f32 %v280, %v1144
    %v1149 = vxor.u32 %v1147, 2147483648
    %v1150 = vxor.u32 %v1148, 2147483648
    %v1151 = vmul.f32 %v1149, 1.442695
    %v1152 = vpow.pop %v1151
    %v1153 = vmul.f32 %v1150, 1.442695
    %v1154 = vpow.pop %v1153
    %v1155 = vadd.f32 %v1152, 1.0
    %v1156 = vadd.f32 %v1154, 1.0
    %v1157 = vrcp.pop %v1155
    %v1158 = vmul.f32 %v1155, %v1157
    %v1159 = vsub.f32 1.0, %v1158
    %v1160 = vmul.f32 %v1157, %v1159
    %v1161 = vadd.f32 %v1157, %v1160
    %vm1162 = vweird.f32 %v1155
    %vm1163 = vweird.f32 %v1157
    %vm1164 = vmor %vm1162, %vm1163
    %v1165 = vsel %vm1164, %v1157, %v1161
    %v1166 = vand.u32 2147483647, %v1155
    %vm1167 = vcmp.eq.f32.partialorder %v1166, 8.507059e+37
    %v1168 = vand.u32 %v1155, 2147483648
    %v1169 = vor.u32 1.1754944e-38, %v1168
    %v1170 = vsel %vm1167, %v1169, %v1165
    %v1171 = vmul.f32 1.0, %v1170
    %v1172 = vrcp.pop %v1156
    %v1173 = vmul.f32 %v1156, %v1172
    %v1174 = vsub.f32 1.0, %v1173
    %v1175 = vmul.f32 %v1172, %v1174
    %v1176 = vadd.f32 %v1172, %v1175
    %vm1177 = vweird.f32 %v1156
    %vm1178 = vweird.f32 %v1172
    %vm1179 = vmor %vm1177, %vm1178
    %v1180 = vsel %vm1179, %v1172, %v1176
    %v1181 = vand.u32 2147483647, %v1156
    %vm1182 = vcmp.eq.f32.partialorder %v1181, 8.507059e+37
    %v1183 = vand.u32 %v1156, 2147483648
    %v1184 = vor.u32 1.1754944e-38, %v1183
    %v1185 = vsel %vm1182, %v1184, %v1180
    %v1186 = vmul.f32 1.0, %v1185
    %v1187 = vtanh.pop %v1148
    %v1189 = vrot.slane %v1097, 4
    %1190 = vrot.lane.b32.xlu0 %v1189, 64
    %v1191 = vpop.permute.xlu0 %1190
    %v1193 = vmul.f32 %v1171, %v1191
    %1195 = vrot.lane.b32.xlu0 %v1187, 64
    %v1196 = vpop.permute.xlu0 %1195
    %v1198 = vmul.f32 %v1171, %v1196
    %1200 = vrot.lane.b32.xlu0 %v1198, 64
    %v1201 = vpop.permute.xlu0 %1200
    %v1203 = vadd.f32 %v1193, %v1201
    %v1204 = vtanh.pop %v1203
    %1206 = vrot.lane.b32.xlu0 %v1204, 64
    %v1207 = vpop.permute.xlu0 %1206
    %v1209 = vmul.f32 %v1186, %v1207
    %v1210 = vsel %vm410, %v538, %v534
    %v1212 = vrot.slane %v1209, 4
    %v1214 = vmul.f32 %v1210, %v1212
    %v1215 = vadd.f32 %v1081, %v1214
    %v1216 = vrot.slane %v1089, 4
    %v1218 = vsub.f32 %v1209, %v1216
    %v1220 = vrot.slane %v1218, 4
    %v1222 = vmul.f32 %v1210, %v1220
    %v1223 = vadd.f32 %v1089, %v1222
    %v1224 = vsub.f32 %v1203, %v1191
    %v1226 = vrot.slane %v1224, 4
    %1227 = vrot.lane.b32.xlu0 %v1226, 64
    %v1228 = vpop.permute.xlu0 %1227
    %v1230 = vmul.f32 %v1210, %v1228
    %v1231 = vadd.f32 %v1097, %v1230
    %v1233 = vsel %vm229, %v1223, 0
    %1235 = vmatpush.msra.mxu0 0.0
    %1236 = vmatpush.msra.mxu0 0.0
    %1237 = vmatpush.msra.mxu0 0.0
    %1238 = vmatpush.msra.mxu0 0.0
    %1239 = vmatpush.msra.mxu0 0.0
    %1240 = vmatpush.msra.mxu0 0.0
    %1241 = vmatpush.msra.mxu0 0.0
    %1242 = vmatpush.msra.mxu0 0.0
    %1243 = vmatpush.msra.mxu0 %v298
    %1244 = vmatpush.msra.mxu0 %v296
    %1245 = vmatpush.msra.mxu0 %v294
    %1246 = vmatpush.msra.mxu0 %v292
    %1247 = vmatpush.msra.mxu0 %v290
    %1248 = vmatpush.msra.mxu0 %v288
    %1249 = vmatpush.msra.mxu0 %v286
    %1250 = vmatpush.msra.mxu0 %v284
    %1251 = vmatmul.f32.gmra.mxu0 %v1233
    %v1252 = vpop.f32.mrf.mxu0
    %v1253 = vadd.f32 0.0, %v1252
    %1254 = vdwg.mxu0
    %1255 = vmatpush.msra.mxu0 0.0
    %1256 = vmatpush.msra.mxu0 0.0
    %1257 = vmatpush.msra.mxu0 0.0
    %1258 = vmatpush.msra.mxu0 0.0
    %1259 = vmatpush.msra.mxu0 0.0
    %1260 = vmatpush.msra.mxu0 0.0
    %1261 = vmatpush.msra.mxu0 0.0
    %1262 = vmatpush.msra.mxu0 0.0
    %1263 = vmatpush.msra.mxu0 %v299
    %1264 = vmatpush.msra.mxu0 %v297
    %1265 = vmatpush.msra.mxu0 %v295
    %1266 = vmatpush.msra.mxu0 %v293
    %1267 = vmatpush.msra.mxu0 %v291
    %1268 = vmatpush.msra.mxu0 %v289
    %1269 = vmatpush.msra.mxu0 %v287
    %1270 = vmatpush.msra.mxu0 %v285
    %1271 = vmatmul.f32.gmra.mxu0 %v1233
    %v1272 = vpop.f32.mrf.mxu0
    %v1273 = vadd.f32 0.0, %v1272
    %1274 = vdwg.mxu0
    %v1277 = vrot.slane %v1253, 2
    %v1278 = vrot.slane %v1273, 2
    %v1281 = vadd.f32 %v257, %v1277
    %v1282 = vadd.f32 %v280, %v1278
    %v1283 = vxor.u32 %v1281, 2147483648
    %v1284 = vxor.u32 %v1282, 2147483648
    %v1285 = vmul.f32 %v1283, 1.442695
    %v1286 = vpow.pop %v1285
    %v1287 = vmul.f32 %v1284, 1.442695
    %v1288 = vpow.pop %v1287
    %v1289 = vadd.f32 %v1286, 1.0
    %v1290 = vadd.f32 %v1288, 1.0
    %v1291 = vrcp.pop %v1289
    %v1292 = vmul.f32 %v1289, %v1291
    %v1293 = vsub.f32 1.0, %v1292
    %v1294 = vmul.f32 %v1291, %v1293
    %v1295 = vadd.f32 %v1291, %v1294
    %vm1296 = vweird.f32 %v1289
    %vm1297 = vweird.f32 %v1291
    %vm1298 = vmor %vm1296, %vm1297
    %v1299 = vsel %vm1298, %v1291, %v1295
    %v1300 = vand.u32 2147483647, %v1289
    %vm1301 = vcmp.eq.f32.partialorder %v1300, 8.507059e+37
    %v1302 = vand.u32 %v1289, 2147483648
    %v1303 = vor.u32 1.1754944e-38, %v1302
    %v1304 = vsel %vm1301, %v1303, %v1299
    %v1305 = vmul.f32 1.0, %v1304
    %v1306 = vrcp.pop %v1290
    %v1307 = vmul.f32 %v1290, %v1306
    %v1308 = vsub.f32 1.0, %v1307
    %v1309 = vmul.f32 %v1306, %v1308
    %v1310 = vadd.f32 %v1306, %v1309
    %vm1311 = vweird.f32 %v1290
    %vm1312 = vweird.f32 %v1306
    %vm1313 = vmor %vm1311, %vm1312
    %v1314 = vsel %vm1313, %v1306, %v1310
    %v1315 = vand.u32 2147483647, %v1290
    %vm1316 = vcmp.eq.f32.partialorder %v1315, 8.507059e+37
    %v1317 = vand.u32 %v1290, 2147483648
    %v1318 = vor.u32 1.1754944e-38, %v1317
    %v1319 = vsel %vm1316, %v1318, %v1314
    %v1320 = vmul.f32 1.0, %v1319
    %v1321 = vtanh.pop %v1282
    %v1323 = vrot.slane %v1231, 2
    %1324 = vrot.lane.b32.xlu0 %v1323, 64
    %v1325 = vpop.permute.xlu0 %1324
    %v1327 = vmul.f32 %v1305, %v1325
    %1329 = vrot.lane.b32.xlu0 %v1321, 64
    %v1330 = vpop.permute.xlu0 %1329
    %v1332 = vmul.f32 %v1305, %v1330
    %1334 = vrot.lane.b32.xlu0 %v1332, 64
    %v1335 = vpop.permute.xlu0 %1334
    %v1337 = vadd.f32 %v1327, %v1335
    %v1338 = vtanh.pop %v1337
    %1340 = vrot.lane.b32.xlu0 %v1338, 64
    %v1341 = vpop.permute.xlu0 %1340
    %v1343 = vmul.f32 %v1320, %v1341
    %v1344 = vsel %vm410, %v408, %v404
    %v1346 = vrot.slane %v1343, 6
    %v1348 = vmul.f32 %v1344, %v1346
    %v1349 = vadd.f32 %v1215, %v1348
    %vm1350 = vcmask 58368
    %v1351 = vsel %vm1350, %v283, 0.0
    %1352 = vadd.xlane.f32.xlu0 %v1351
    %v1353 = vpop.xlane.xlu0 %1352
    %vm1354 = vcmask 1041408
    %v1355 = vsel %vm1354, %v1353, -inf
    %v1356 = vrot.slane %v1355, 4
    %v1357 = vmax.f32 %v1355, %v1356
    %v1358 = vrot.slane %v1357, 2
    %v1359 = vmax.f32 %v1357, %v1358
    %v1360 = vrot.slane %v1359, 1
    %v1361 = vmax.f32 %v1359, %v1360
    %v1362 = vmax.f32 %v1361, 1.0
    %v1363 = vrcp.pop %v1362
    %v1364 = vmul.f32 %v1362, %v1363
    %v1365 = vsub.f32 1.0, %v1364
    %v1366 = vmul.f32 %v1363, %v1365
    %v1367 = vadd.f32 %v1363, %v1366
    %vm1368 = vweird.f32 %v1362
    %vm1369 = vweird.f32 %v1363
    %vm1370 = vmor %vm1368, %vm1369
    %v1371 = vsel %vm1370, %v1363, %v1367
    %v1372 = vand.u32 2147483647, %v1362
    %vm1373 = vcmp.eq.f32.partialorder %v1372, 8.507059e+37
    %v1374 = vand.u32 %v1362, 2147483648
    %v1375 = vor.u32 1.1754944e-38, %v1374
    %v1376 = vsel %vm1373, %v1375, %v1371
    %v1377 = vmul.f32 1.0, %v1376
    %v1378 = vld [vmem:[%s6] sm:$0xff]
    %v1379 = vld [vmem:[%s6 + $0x8] sm:$0xff]
    %v1380 = vld [vmem:[%s6 + $0x10] sm:$0xff]
    %v1381 = vld [vmem:[%s6 + $0x18] sm:$0xff]
    %v1382 = vld [vmem:[%s6 + $0x20] sm:$0xff]
    %v1383 = vld [vmem:[%s6 + $0x28] sm:$0xff]
    %v1384 = vld [vmem:[%s6 + $0x30] sm:$0xff]
    %v1385 = vld [vmem:[%s6 + $0x38] sm:$0xff]
    %v1387 = vsel %vm229, %v1349, 0
    %1389 = vmatpush.msra.mxu0 0.0
    %1390 = vmatpush.msra.mxu0 0.0
    %1391 = vmatpush.msra.mxu0 0.0
    %1392 = vmatpush.msra.mxu0 0.0
    %1393 = vmatpush.msra.mxu0 0.0
    %1394 = vmatpush.msra.mxu0 0.0
    %1395 = vmatpush.msra.mxu0 0.0
    %1396 = vmatpush.msra.mxu0 0.0
    %1397 = vmatpush.msra.mxu0 %v1385
    %1398 = vmatpush.msra.mxu0 %v1384
    %1399 = vmatpush.msra.mxu0 %v1383
    %1400 = vmatpush.msra.mxu0 %v1382
    %1401 = vmatpush.msra.mxu0 %v1381
    %1402 = vmatpush.msra.mxu0 %v1380
    %1403 = vmatpush.msra.mxu0 %v1379
    %1404 = vmatpush.msra.mxu0 %v1378
    %1405 = vmatmul.f32.gmra.mxu0 %v1387
    %v1406 = vpop.f32.mrf.mxu0
    %v1407 = vadd.f32 0.0, %v1406
    %1408 = vdwg.mxu0
    %v1409 = vmul.f32 %v1407, %v1377
    %v1410 = vld [vmem:[%s7] sm:$0x1]
    %v1412 = vperm.slane %v1410, 0
    %v1414 = vadd.f32 %v1409, %v1412
    %vm1415 = vcmask 25600
    %1416 = vst.msk [vmem:[#allocation8] sm:$0x3] %vm1415, %v1414
    // Predicated region
    $region42: #{tpu_custom_call.1} parent=1 // pred_check
      _
    $region43: #{tpu_custom_call.1} parent=1 // pred_check_branch
      %1418 = sbr.rel (0) target = $region45
    $region44: #{tpu_custom_call.1} parent=1 // pred_region
      %1420 = vsyncadd [#allocation5], 0
      %s1422 = sshll.u32 [#allocation8], 4
      %s1423 = int_to_ptr.vmem [resolvable:$true] %s1422
      %s1424 = sshll.u32 %s8, 4
      %s1425 = int_to_ptr.hbm [resolvable:$true] %s1424
      %1427 = dma.vmem_to_hbm [thread:$0]  %s1423, 32, %s1425, [#allocation5]
    $region45: #{tpu_custom_call.1} parent=1 // pred_fallthru
      _
    // Predicated region
    $region46: #{tpu_custom_call.1} parent=1 // pred_check
      _
    $region47: #{tpu_custom_call.1} parent=1 // pred_check_branch
      %1429 = sbr.rel (0) target = $region49
    $region48: #{tpu_custom_call.1} parent=1 // pred_region
      %1431 = dma.done [#allocation5], 32
    $region49: #{tpu_custom_call.1} parent=1 // pred_fallthru
      _
    %1432 = vsyncpa [#allocation4], 1
    %1433 = vsyncpa [#allocation5], 1
    %1434 = vsyncpa [#allocation6], 1

</llo_original>
